<compile_context>
chip_gen: v5e
topology: v5e:2x2
jax: 0.10.0
libtpu: 0.0.40
codegen_flags: <defaults>
</compile_context>

<pallas_src>
import numpy as np
import jax
import jax.numpy as jnp
from jax import lax
from jax.experimental import pallas as pl
from jax.experimental.pallas import tpu as pltpu

# ---------------- configuration (small shapes consistent with the module) ----
DIM = 32                 # channels
NUM_HEADS = 4
HEAD_DIM = DIM // NUM_HEADS
AGENT_NUM = 16           # agent tokens
POOL = int(AGENT_NUM ** 0.5)
WINDOW = 8               # h = w = window, n = window**2
N = WINDOW * WINDOW
BATCH = 2
SCALE = HEAD_DIM ** (-0.5)
NHA = NUM_HEADS * AGENT_NUM          # 64: packed (head, agent) axis
PAD = 16                             # sublane-tile-aligned halo for the dwc scratch
TAP_OFFSETS = tuple((ki - 1) * WINDOW + (kj - 1)
                    for ki in range(3) for kj in range(3))   # token offset per tap


# ---------------- parameter-prep helpers (plain JAX / numpy glue) ------------
def bilinear_resize(x, out_hw):
    """Matches F.interpolate(..., mode='bilinear', align_corners=False)."""
    H, W = x.shape[-2], x.shape[-1]
    oh, ow = out_hw

    def src_idx(out_size, in_size):
        scale = in_size / out_size
        s = (jnp.arange(out_size, dtype=jnp.float32) + 0.5) * scale - 0.5
        s = jnp.maximum(s, 0.0)               # PyTorch clamps negative src idx
        i0 = jnp.floor(s).astype(jnp.int32)
        i0 = jnp.minimum(i0, in_size - 1)
        i1 = jnp.minimum(i0 + 1, in_size - 1)
        frac = s - i0.astype(jnp.float32)
        return i0, i1, frac

    y0, y1, fy = src_idx(oh, H)
    x0, x1, fx = src_idx(ow, W)
    top = x[..., y0, :]
    bot = x[..., y1, :]
    rows = top * (1.0 - fy)[:, None] + bot * fy[:, None]
    left = rows[..., :, x0]
    right = rows[..., :, x1]
    return left * (1.0 - fx) + right * fx


def make_pool_matrix(h, w, ph, pw):
    """AdaptiveAvgPool2d((ph, pw)) as a (ph*pw, h*w) matrix."""
    P = np.zeros((ph * pw, h * w), np.float32)
    for oi in range(ph):
        i0 = (oi * h) // ph
        i1 = -(-((oi + 1) * h) // ph)
        for oj in range(pw):
            j0 = (oj * w) // pw
            j1 = -(-((oj + 1) * w) // pw)
            area = (i1 - i0) * (j1 - j0)
            for i in range(i0, i1):
                for j in range(j0, j1):
                    P[oi * pw + oj, i * w + j] = 1.0 / area
    return P


def make_block_diag_mask(nh, a, hd):
    """(nh*a, nh*hd) mask: block h rows see only head h's channels."""
    m = np.zeros((nh * a, nh * hd), np.float32)
    for h in range(nh):
        m[h * a:(h + 1) * a, h * hd:(h + 1) * hd] = 1.0
    return m


def make_group_sum_matrix(nh, a):
    """(nh*a, nh*a): e @ G broadcasts each 16-lane group's sum to its lanes."""
    g = np.zeros((nh * a, nh * a), np.float32)
    for h in range(nh):
        g[h * a:(h + 1) * a, h * a:(h + 1) * a] = 1.0
    return g


def make_dwc_wmask(dwc_w, h, w):
    """(9, h*w, C): per-tap depthwise weight * zero-pad validity of the source."""
    wnp = np.asarray(dwc_w)                      # (C, 1, 3, 3)
    C = wnp.shape[0]
    wm = np.zeros((9, h * w, C), np.float32)
    for ki in range(3):
        for kj in range(3):
            t = ki * 3 + kj
            for i in range(h):
                for j in range(w):
                    si, sj = i + ki - 1, j + kj - 1
                    if 0 <= si < h and 0 <= sj < w:
                        wm[t, i * w + j, :] = wnp[:, 0, ki, kj]
    return wm


# ---------------- the Pallas kernel ------------------------------------------
def agent_attention_kernel(x_ref, wqkv_ref, wproj_ref, bproj_ref, dwcb_ref,
                           pool_ref, bd_ref, seg_ref, posb_ref, agentb_ref,
                           wmask_ref, o_ref, pad_ref):
    # x_ref: (N, C); wqkv_ref: (C, 3C); wproj_ref: (C, C); bproj_ref: (1, C)
    # dwcb_ref: (1, C); pool_ref: (A, N) (SCALE folded in)
    # bd_ref: (NH*A, C) block-diag head mask; seg_ref: (NH*A, NH*A) group sums
    # posb_ref: (NH*A, N); agentb_ref: (N, NH*A); wmask_ref: (9, N, C)
    # o_ref: (N, C); pad_ref: (N + 2*PAD, C) VMEM scratch
    f32 = jnp.float32
    nt = (((1,), (1,)), ((), ()))                # contract on last dims (A @ B^T)

    x = x_ref[...]                                                   # (N, C)
    qkv = jnp.dot(x, wqkv_ref[...], preferred_element_type=f32)      # (N, 3C)
    q = qkv[:, 0:DIM]
    k = qkv[:, DIM:2 * DIM]
    v = qkv[:, 2 * DIM:3 * DIM]

    # ---- depthwise 3x3 conv on v: stage v in a zero-padded scratch, then 9
    #      shifted reads * (weight x validity) masks.  No MXU, no shift matrices.
    pad_ref[pl.ds(0, PAD), :] = jnp.zeros((PAD, DIM), f32)
    pad_ref[pl.ds(PAD + N, PAD), :] = jnp.zeros((PAD, DIM), f32)
    pad_ref[pl.ds(PAD, N), :] = v
    conv = jnp.broadcast_to(dwcb_ref[...], (N, DIM))
    for t, off in enumerate(TAP_OFFSETS):
        conv = conv + pad_ref[pl.ds(PAD + off, N), :] * wmask_ref[t]

    # ---- agent tokens (adaptive pool, SCALE pre-folded), block-diag packed ---
    agent = jnp.dot(pool_ref[...], q, preferred_element_type=f32)    # (A, C)
    bd = bd_ref[...]                                                 # (NH*A, C)
    agent_bd = jnp.concatenate([agent, agent, agent, agent], axis=0) * bd

    # ---- agent attention: all heads in one (NH*A, N) score matrix -----------
    s1 = lax.dot_general(agent_bd, k, nt, preferred_element_type=f32) + posb_ref[...]
    m1 = jnp.max(s1, axis=-1, keepdims=True)
    e1 = jnp.exp(s1 - m1)
    p1 = e1 * pl.reciprocal(jnp.sum(e1, axis=-1, keepdims=True), approx=True)
    # agent_v packed block-diagonally: head h's values live in its channel block
    agent_v_bd = jnp.dot(p1, v, preferred_element_type=f32) * bd     # (NH*A, C)

    # ---- query attention over agents: (N, NH*A), lane-segmented softmax -----
    s2 = lax.dot_general(q, agent_bd, nt, preferred_element_type=f32) + agentb_ref[...]
    m2 = jnp.max(s2, axis=-1, keepdims=True)     # row max is a valid stabilizer
    e2 = jnp.exp(s2 - m2)
    d2 = jnp.dot(e2, seg_ref[...], preferred_element_type=f32)       # per-head sums
    p2 = e2 * pl.reciprocal(d2, approx=True)
    attn = jnp.dot(p2, agent_v_bd, preferred_element_type=f32)       # (N, C)

    # ---- residual with conv, single output projection ------------------------
    out = jnp.dot(attn + conv, wproj_ref[...], preferred_element_type=f32) + bproj_ref[...]
    # attn_drop / proj_drop are identity (p = 0, eval mode)
    o_ref[...] = out.astype(o_ref.dtype)


def agent_attention(x, p):
    b, n, c = x.shape
    in_specs = [
        pl.BlockSpec((None, n, c), lambda i: (i, 0, 0)),              # x
        pl.BlockSpec((c, 3 * c), lambda i: (0, 0)),                   # W_qkv^T
        pl.BlockSpec((c, c), lambda i: (0, 0)),                       # W_proj^T
        pl.BlockSpec((1, c), lambda i: (0, 0)),                       # b_proj
        pl.BlockSpec((1, c), lambda i: (0, 0)),                       # dwc bias
        pl.BlockSpec((AGENT_NUM, n), lambda i: (0, 0)),               # SCALE * pool matrix
        pl.BlockSpec((NHA, c), lambda i: (0, 0)),                     # block-diag head mask
        pl.BlockSpec((NHA, NHA), lambda i: (0, 0)),                   # seg-softmax group sums
        pl.BlockSpec((NHA, n), lambda i: (0, 0)),                     # packed position_bias
        pl.BlockSpec((n, NHA), lambda i: (0, 0)),                     # packed agent_bias
        pl.BlockSpec((9, n, c), lambda i: (0, 0, 0)),                 # dwc weight*validity
    ]
    out_spec = pl.BlockSpec((None, n, c), lambda i: (i, 0, 0))
    return pl.pallas_call(
        agent_attention_kernel,
        out_shape=jax.ShapeDtypeStruct((b, n, c), jnp.float32),
        grid_spec=pltpu.PrefetchScalarGridSpec(
            num_scalar_prefetch=0,
            grid=(b,),
            in_specs=in_specs,
            out_specs=out_spec,
            scratch_shapes=[pltpu.VMEM((n + 2 * PAD, c), jnp.float32)],
        ),
        compiler_params=pltpu.CompilerParams(
            dimension_semantics=("parallel",)),   # batch is independent -> 2x on v7x
    )(x, p["wqkv_t"], p["wproj_t"], p["bproj"], p["dwc_b"],
      p["pool_scaled"], p["bd_mask"], p["seg_sum"],
      p["pos_bias_packed"], p["agent_bias_packed"], p["dwc_wmask"])


# ---------------- deterministic parameter init --------------------------------
def init_params(key):
    ks = jax.random.split(key, 11)
    f32 = jnp.float32
    wqkv = jax.random.normal(ks[0], (3 * DIM, DIM), f32) * 0.05    # torch Linear: (out, in)
    wproj = jax.random.normal(ks[1], (DIM, DIM), f32) * 0.05
    bproj = jax.random.normal(ks[2], (DIM,), f32) * 0.01
    dwc_w = jax.random.normal(ks[3], (DIM, 1, 3, 3), f32) * 0.05   # depthwise conv
    dwc_b = jax.random.normal(ks[4], (DIM,), f32) * 0.01

    def trunc(k, shape):
        return 0.02 * jax.random.truncated_normal(k, -2.0, 2.0, shape, f32)

    an_bias = trunc(ks[5], (NUM_HEADS, AGENT_NUM, 7, 7))
    ah_bias = trunc(ks[6], (1, NUM_HEADS, AGENT_NUM, WINDOW, 1))
    aw_bias = trunc(ks[7], (1, NUM_HEADS, AGENT_NUM, 1, WINDOW))
    na_bias = trunc(ks[8], (NUM_HEADS, AGENT_NUM, 7, 7))
    ha_bias = trunc(ks[9], (1, NUM_HEADS, WINDOW, 1, AGENT_NUM))
    wa_bias = trunc(ks[10], (1, NUM_HEADS, 1, WINDOW, AGENT_NUM))

    # parameter preprocessing (matches the forward's bias construction)
    pos_bias1 = bilinear_resize(an_bias, (WINDOW, WINDOW)).reshape(NUM_HEADS, AGENT_NUM, N)
    pos_bias2 = (ah_bias + aw_bias).reshape(NUM_HEADS, AGENT_NUM, N)
    pos_bias = pos_bias1 + pos_bias2                                           # (NH, A, N)

    agent_bias1 = bilinear_resize(na_bias, (WINDOW, WINDOW)).reshape(
        NUM_HEADS, AGENT_NUM, N).transpose(0, 2, 1)
    agent_bias2 = (ha_bias + wa_bias).reshape(NUM_HEADS, N, AGENT_NUM)
    agent_bias = agent_bias1 + agent_bias2                                     # (NH, N, A)

    kernel_params = {
        "wqkv_t": wqkv.T,                                            # (C, 3C)
        "wproj_t": wproj.T,                                          # (C, C)
        "bproj": bproj.reshape(1, DIM),
        "dwc_b": dwc_b.reshape(1, DIM),
        # SCALE folded into the pooling matrix (covers both s1 and s2 scaling).
        "pool_scaled": jnp.asarray(SCALE * make_pool_matrix(WINDOW, WINDOW, POOL, POOL)),
        "bd_mask": jnp.asarray(make_block_diag_mask(NUM_HEADS, AGENT_NUM, HEAD_DIM)),
        "seg_sum": jnp.asarray(make_group_sum_matrix(NUM_HEADS, AGENT_NUM)),
        "pos_bias_packed": pos_bias.reshape(NHA, N),                 # row = h*A + agent
        "agent_bias_packed": jnp.transpose(agent_bias, (1, 0, 2)).reshape(N, NHA),
        "dwc_wmask": jnp.asarray(make_dwc_wmask(dwc_w, WINDOW, WINDOW)),
    }
    raw_params = {
        "wqkv": wqkv, "wproj": wproj, "bproj": bproj,
        "dwc_w": dwc_w, "dwc_b": dwc_b,
        "pos_bias": pos_bias, "agent_bias": agent_bias,
    }
    return kernel_params, raw_params


# ---------------- pure-JAX reference (mirrors the PyTorch forward) -------------
def reference(x, raw):
    hp = jax.lax.Precision.HIGHEST
    b, n, c = x.shape
    h = w = WINDOW
    qkv = jnp.einsum("bnc,dc->bnd", x, raw["wqkv"], precision=hp)
    q, k, v = qkv[..., :c], qkv[..., c:2 * c], qkv[..., 2 * c:]

    q_img = q.reshape(b, h, w, c)
    kh, kw = h // POOL, w // POOL
    agent = q_img.reshape(b, POOL, kh, POOL, kw, c).mean(axis=(2, 4)).reshape(b, AGENT_NUM, c)

    def heads(t, L):
        return t.reshape(b, L, NUM_HEADS, HEAD_DIM).transpose(0, 2, 1, 3)

    qh, kk, vv = heads(q, n), heads(k, n), heads(v, n)
    ah = heads(agent, AGENT_NUM)

    s1 = jnp.einsum("bhad,bhnd->bhan", ah * SCALE, kk, precision=hp) + raw["pos_bias"][None]
    p1 = jax.nn.softmax(s1, axis=-1)
    agent_v = jnp.einsum("bhan,bhnd->bhad", p1, vv, precision=hp)
    s2 = jnp.einsum("bhnd,bhad->bhna", qh * SCALE, ah, precision=hp) + raw["agent_bias"][None]
    p2 = jax.nn.softmax(s2, axis=-1)
    o = jnp.einsum("bhna,bhad->bhnd", p2, agent_v, precision=hp)
    o = o.transpose(0, 2, 1, 3).reshape(b, n, c)

    v_img = v.reshape(b, h, w, c).transpose(0, 3, 1, 2)        # NCHW
    conv = jax.lax.conv_general_dilated(
        v_img, raw["dwc_w"], window_strides=(1, 1), padding="SAME",
        feature_group_count=c, dimension_numbers=("NCHW", "OIHW", "NCHW"),
        precision=hp)
    conv = conv + raw["dwc_b"][None, :, None, None]
    o = o + conv.transpose(0, 2, 3, 1).reshape(b, n, c)
    return jnp.einsum("bnc,dc->bnd", o, raw["wproj"], precision=hp) + raw["bproj"][None, None]


if __name__ == "__main__":
    key = jax.random.PRNGKey(0)
    kx, kp = jax.random.split(key)
    x = jax.random.normal(kx, (BATCH, N, DIM), jnp.float32)
    params, raw = init_params(kp)

    out = agent_attention(x, params)
    jax.block_until_ready(out)

    ref = reference(x, raw)
    np.testing.assert_allclose(np.asarray(out), np.asarray(ref), rtol=3e-3, atol=3e-3)
    print("KERNEL_OK")
</pallas_src>

<mosaic_0001>
module attributes {stable_mosaic.version = 11 : i64} {
  func.func @agent_attention_kernel(%arg0: i32, %arg1: memref<1x64x32xf32, #tpu.memory_space<vmem>>, %arg2: memref<32x96xf32, #tpu.memory_space<vmem>>, %arg3: memref<32x32xf32, #tpu.memory_space<vmem>>, %arg4: memref<1x32xf32, #tpu.memory_space<vmem>>, %arg5: memref<1x32xf32, #tpu.memory_space<vmem>>, %arg6: memref<16x64xf32, #tpu.memory_space<vmem>>, %arg7: memref<64x32xf32, #tpu.memory_space<vmem>>, %arg8: memref<64x64xf32, #tpu.memory_space<vmem>>, %arg9: memref<64x64xf32, #tpu.memory_space<vmem>>, %arg10: memref<64x64xf32, #tpu.memory_space<vmem>>, %arg11: memref<9x64x32xf32, #tpu.memory_space<vmem>>, %arg12: memref<1x64x32xf32, #tpu.memory_space<vmem>>, %arg13: memref<96x32xf32, #tpu.memory_space<vmem>>) attributes {dimension_semantics = [#tpu.dimension_semantics<parallel>], iteration_bounds = array<i64: 2>, scalar_prefetch = 0 : i64, scratch_operands = 1 : i64, tpu.core_type = #tpu.core_type<tc>, window_params = [{transform_indices = @transform_0, window_bounds = array<i64: 1, 64, 32>}, {pipeline_mode = #tpu.pipeline_mode<synchronous>, transform_indices = @transform_1, window_bounds = array<i64: 32, 96>}, {pipeline_mode = #tpu.pipeline_mode<synchronous>, transform_indices = @transform_2, window_bounds = array<i64: 32, 32>}, {pipeline_mode = #tpu.pipeline_mode<synchronous>, transform_indices = @transform_3, window_bounds = array<i64: 1, 32>}, {pipeline_mode = #tpu.pipeline_mode<synchronous>, transform_indices = @transform_4, window_bounds = array<i64: 1, 32>}, {pipeline_mode = #tpu.pipeline_mode<synchronous>, transform_indices = @transform_5, window_bounds = array<i64: 16, 64>}, {pipeline_mode = #tpu.pipeline_mode<synchronous>, transform_indices = @transform_6, window_bounds = array<i64: 64, 32>}, {pipeline_mode = #tpu.pipeline_mode<synchronous>, transform_indices = @transform_7, window_bounds = array<i64: 64, 64>}, {pipeline_mode = #tpu.pipeline_mode<synchronous>, transform_indices = @transform_8, window_bounds = array<i64: 64, 64>}, {pipeline_mode = #tpu.pipeline_mode<synchronous>, transform_indices = @transform_9, window_bounds = array<i64: 64, 64>}, {pipeline_mode = #tpu.pipeline_mode<synchronous>, transform_indices = @transform_10, window_bounds = array<i64: 9, 64, 32>}, {transform_indices = @transform_11, window_bounds = array<i64: 1, 64, 32>}]} {
    %c0 = arith.constant 0 : index
    %c0_0 = arith.constant 0 : index
    %c0_1 = arith.constant 0 : index
    %0 = vector.load %arg1[%c0, %c0_0, %c0_1] : memref<1x64x32xf32, #tpu.memory_space<vmem>>, vector<1x64x32xf32>
    %1 = vector.shape_cast %0 : vector<1x64x32xf32> to vector<64x32xf32>
    %c0_2 = arith.constant 0 : index
    %c0_3 = arith.constant 0 : index
    %2 = vector.load %arg2[%c0_2, %c0_3] : memref<32x96xf32, #tpu.memory_space<vmem>>, vector<32x96xf32>
    %cst = arith.constant dense<0.000000e+00> : vector<64x96xf32>
    %3 = tpu.matmul %1, %2, %cst {dimension_numbers = #tpu.dot_dimension_numbers<[1], [0], [0], [1], [0, 0, 1, 1], [], []>} : vector<64x32xf32>, vector<32x96xf32>, vector<64x96xf32> -> vector<64x96xf32>
    %4 = vector.extract_strided_slice %3 {offsets = [0, 0], sizes = [64, 32], strides = [1, 1]} : vector<64x96xf32> to vector<64x32xf32>
    %5 = vector.extract_strided_slice %3 {offsets = [0, 32], sizes = [64, 32], strides = [1, 1]} : vector<64x96xf32> to vector<64x32xf32>
    %6 = vector.extract_strided_slice %3 {offsets = [0, 64], sizes = [64, 32], strides = [1, 1]} : vector<64x96xf32> to vector<64x32xf32>
    %cst_4 = arith.constant 0.000000e+00 : f32
    %7 = vector.broadcast %cst_4 : f32 to vector<16x32xf32>
    %c0_5 = arith.constant 0 : index
    %c0_6 = arith.constant 0 : index
    %8 = vector.load %arg13[%c0_5, %c0_6] : memref<96x32xf32, #tpu.memory_space<vmem>>, vector<16x32xf32>
    tpu.vector_store %arg13[%c0_5, %c0_6], %7 {strides = array<i32>} : memref<96x32xf32, #tpu.memory_space<vmem>>, vector<16x32xf32>,
    %cst_7 = arith.constant 0.000000e+00 : f32
    %9 = vector.broadcast %cst_7 : f32 to vector<16x32xf32>
    %c80 = arith.constant 80 : index
    %c0_8 = arith.constant 0 : index
    %10 = vector.load %arg13[%c80, %c0_8] : memref<96x32xf32, #tpu.memory_space<vmem>>, vector<16x32xf32>
    tpu.vector_store %arg13[%c80, %c0_8], %9 {strides = array<i32>} : memref<96x32xf32, #tpu.memory_space<vmem>>, vector<16x32xf32>,
    %c16 = arith.constant 16 : index
    %c0_9 = arith.constant 0 : index
    %11 = vector.load %arg13[%c16, %c0_9] : memref<96x32xf32, #tpu.memory_space<vmem>>, vector<64x32xf32>
    tpu.vector_store %arg13[%c16, %c0_9], %6 {strides = array<i32>} : memref<96x32xf32, #tpu.memory_space<vmem>>, vector<64x32xf32>,
    %c0_10 = arith.constant 0 : index
    %c0_11 = arith.constant 0 : index
    %12 = vector.load %arg5[%c0_10, %c0_11] : memref<1x32xf32, #tpu.memory_space<vmem>>, vector<1x32xf32>
    %13 = vector.shape_cast %12 : vector<1x32xf32> to vector<1x32xf32>
    %14 = vector.broadcast %13 : vector<1x32xf32> to vector<64x32xf32>
    %c7 = arith.constant 7 : index
    %c0_12 = arith.constant 0 : index
    %15 = vector.load %arg13[%c7, %c0_12] : memref<96x32xf32, #tpu.memory_space<vmem>>, vector<64x32xf32>
    %c0_13 = arith.constant 0 : index
    %c0_14 = arith.constant 0 : index
    %c0_15 = arith.constant 0 : index
    %16 = vector.load %arg11[%c0_13, %c0_14, %c0_15] : memref<9x64x32xf32, #tpu.memory_space<vmem>>, vector<1x64x32xf32>
    %17 = vector.shape_cast %16 : vector<1x64x32xf32> to vector<64x32xf32>
    %18 = arith.mulf %15, %17 : vector<64x32xf32>
    %19 = arith.addf %14, %18 : vector<64x32xf32>
    %c8 = arith.constant 8 : index
    %c0_16 = arith.constant 0 : index
    %20 = vector.load %arg13[%c8, %c0_16] : memref<96x32xf32, #tpu.memory_space<vmem>>, vector<64x32xf32>
    %c1 = arith.constant 1 : index
    %c0_17 = arith.constant 0 : index
    %c0_18 = arith.constant 0 : index
    %21 = vector.load %arg11[%c1, %c0_17, %c0_18] : memref<9x64x32xf32, #tpu.memory_space<vmem>>, vector<1x64x32xf32>
    %22 = vector.shape_cast %21 : vector<1x64x32xf32> to vector<64x32xf32>
    %23 = arith.mulf %20, %22 : vector<64x32xf32>
    %24 = arith.addf %19, %23 : vector<64x32xf32>
    %c9 = arith.constant 9 : index
    %c0_19 = arith.constant 0 : index
    %25 = vector.load %arg13[%c9, %c0_19] : memref<96x32xf32, #tpu.memory_space<vmem>>, vector<64x32xf32>
    %c2 = arith.constant 2 : index
    %c0_20 = arith.constant 0 : index
    %c0_21 = arith.constant 0 : index
    %26 = vector.load %arg11[%c2, %c0_20, %c0_21] : memref<9x64x32xf32, #tpu.memory_space<vmem>>, vector<1x64x32xf32>
    %27 = vector.shape_cast %26 : vector<1x64x32xf32> to vector<64x32xf32>
    %28 = arith.mulf %25, %27 : vector<64x32xf32>
    %29 = arith.addf %24, %28 : vector<64x32xf32>
    %c15 = arith.constant 15 : index
    %c0_22 = arith.constant 0 : index
    %30 = vector.load %arg13[%c15, %c0_22] : memref<96x32xf32, #tpu.memory_space<vmem>>, vector<64x32xf32>
    %c3 = arith.constant 3 : index
    %c0_23 = arith.constant 0 : index
    %c0_24 = arith.constant 0 : index
    %31 = vector.load %arg11[%c3, %c0_23, %c0_24] : memref<9x64x32xf32, #tpu.memory_space<vmem>>, vector<1x64x32xf32>
    %32 = vector.shape_cast %31 : vector<1x64x32xf32> to vector<64x32xf32>
    %33 = arith.mulf %30, %32 : vector<64x32xf32>
    %34 = arith.addf %29, %33 : vector<64x32xf32>
    %c16_25 = arith.constant 16 : index
    %c0_26 = arith.constant 0 : index
    %35 = vector.load %arg13[%c16_25, %c0_26] : memref<96x32xf32, #tpu.memory_space<vmem>>, vector<64x32xf32>
    %c4 = arith.constant 4 : index
    %c0_27 = arith.constant 0 : index
    %c0_28 = arith.constant 0 : index
    %36 = vector.load %arg11[%c4, %c0_27, %c0_28] : memref<9x64x32xf32, #tpu.memory_space<vmem>>, vector<1x64x32xf32>
    %37 = vector.shape_cast %36 : vector<1x64x32xf32> to vector<64x32xf32>
    %38 = arith.mulf %35, %37 : vector<64x32xf32>
    %39 = arith.addf %34, %38 : vector<64x32xf32>
    %c17 = arith.constant 17 : index
    %c0_29 = arith.constant 0 : index
    %40 = vector.load %arg13[%c17, %c0_29] : memref<96x32xf32, #tpu.memory_space<vmem>>, vector<64x32xf32>
    %c5 = arith.constant 5 : index
    %c0_30 = arith.constant 0 : index
    %c0_31 = arith.constant 0 : index
    %41 = vector.load %arg11[%c5, %c0_30, %c0_31] : memref<9x64x32xf32, #tpu.memory_space<vmem>>, vector<1x64x32xf32>
    %42 = vector.shape_cast %41 : vector<1x64x32xf32> to vector<64x32xf32>
    %43 = arith.mulf %40, %42 : vector<64x32xf32>
    %44 = arith.addf %39, %43 : vector<64x32xf32>
    %c23 = arith.constant 23 : index
    %c0_32 = arith.constant 0 : index
    %45 = vector.load %arg13[%c23, %c0_32] : memref<96x32xf32, #tpu.memory_space<vmem>>, vector<64x32xf32>
    %c6 = arith.constant 6 : index
    %c0_33 = arith.constant 0 : index
    %c0_34 = arith.constant 0 : index
    %46 = vector.load %arg11[%c6, %c0_33, %c0_34] : memref<9x64x32xf32, #tpu.memory_space<vmem>>, vector<1x64x32xf32>
    %47 = vector.shape_cast %46 : vector<1x64x32xf32> to vector<64x32xf32>
    %48 = arith.mulf %45, %47 : vector<64x32xf32>
    %49 = arith.addf %44, %48 : vector<64x32xf32>
    %c24 = arith.constant 24 : index
    %c0_35 = arith.constant 0 : index
    %50 = vector.load %arg13[%c24, %c0_35] : memref<96x32xf32, #tpu.memory_space<vmem>>, vector<64x32xf32>
    %c7_36 = arith.constant 7 : index
    %c0_37 = arith.constant 0 : index
    %c0_38 = arith.constant 0 : index
    %51 = vector.load %arg11[%c7_36, %c0_37, %c0_38] : memref<9x64x32xf32, #tpu.memory_space<vmem>>, vector<1x64x32xf32>
    %52 = vector.shape_cast %51 : vector<1x64x32xf32> to vector<64x32xf32>
    %53 = arith.mulf %50, %52 : vector<64x32xf32>
    %54 = arith.addf %49, %53 : vector<64x32xf32>
    %c25 = arith.constant 25 : index
    %c0_39 = arith.constant 0 : index
    %55 = vector.load %arg13[%c25, %c0_39] : memref<96x32xf32, #tpu.memory_space<vmem>>, vector<64x32xf32>
    %c8_40 = arith.constant 8 : index
    %c0_41 = arith.constant 0 : index
    %c0_42 = arith.constant 0 : index
    %56 = vector.load %arg11[%c8_40, %c0_41, %c0_42] : memref<9x64x32xf32, #tpu.memory_space<vmem>>, vector<1x64x32xf32>
    %57 = vector.shape_cast %56 : vector<1x64x32xf32> to vector<64x32xf32>
    %58 = arith.mulf %55, %57 : vector<64x32xf32>
    %59 = arith.addf %54, %58 : vector<64x32xf32>
    %c0_43 = arith.constant 0 : index
    %c0_44 = arith.constant 0 : index
    %60 = vector.load %arg6[%c0_43, %c0_44] : memref<16x64xf32, #tpu.memory_space<vmem>>, vector<16x64xf32>
    %cst_45 = arith.constant dense<0.000000e+00> : vector<16x32xf32>
    %61 = tpu.matmul %60, %4, %cst_45 {dimension_numbers = #tpu.dot_dimension_numbers<[1], [0], [0], [1], [0, 0, 1, 1], [], []>} : vector<16x64xf32>, vector<64x32xf32>, vector<16x32xf32> -> vector<16x32xf32>
    %c0_46 = arith.constant 0 : index
    %c0_47 = arith.constant 0 : index
    %62 = vector.load %arg7[%c0_46, %c0_47] : memref<64x32xf32, #tpu.memory_space<vmem>>, vector<64x32xf32>
    %63 = tpu.concatenate %61, %61, %61, %61 in 0 : vector<16x32xf32>, vector<16x32xf32>, vector<16x32xf32>, vector<16x32xf32> -> vector<64x32xf32>
    %64 = arith.mulf %63, %62 : vector<64x32xf32>
    %cst_48 = arith.constant dense<0.000000e+00> : vector<64x64xf32>
    %65 = tpu.matmul %64, %5, %cst_48 {dimension_numbers = #tpu.dot_dimension_numbers<[1], [1], [0], [0], [0, 0, 1, 0], [], []>} : vector<64x32xf32>, vector<64x32xf32>, vector<64x64xf32> -> vector<64x64xf32>
    %c0_49 = arith.constant 0 : index
    %c0_50 = arith.constant 0 : index
    %66 = vector.load %arg9[%c0_49, %c0_50] : memref<64x64xf32, #tpu.memory_space<vmem>>, vector<64x64xf32>
    %67 = arith.addf %65, %66 : vector<64x64xf32>
    %cst_51 = arith.constant dense<0xFF800000> : vector<64xf32>
    %68 = vector.multi_reduction <maximumf>, %67, %cst_51 [1] : vector<64x64xf32> to vector<64xf32>
    %69 = vector.shape_cast %68 : vector<64xf32> to vector<64x1xf32>
    %70 = vector.broadcast %69 : vector<64x1xf32> to vector<64x64xf32>
    %71 = arith.subf %67, %70 : vector<64x64xf32>
    %72 = math.exp %71 : vector<64x64xf32>
    %cst_52 = arith.constant dense<0.000000e+00> : vector<64xf32>
    %73 = vector.multi_reduction <add>, %72, %cst_52 [1] : vector<64x64xf32> to vector<64xf32>
    %74 = vector.shape_cast %73 : vector<64xf32> to vector<64x1xf32>
    %75 = tpu.reciprocal %74 {approx = true} : vector<64x1xf32> -> vector<64x1xf32>
    %76 = vector.broadcast %75 : vector<64x1xf32> to vector<64x64xf32>
    %77 = arith.mulf %72, %76 : vector<64x64xf32>
    %cst_53 = arith.constant dense<0.000000e+00> : vector<64x32xf32>
    %78 = tpu.matmul %77, %6, %cst_53 {dimension_numbers = #tpu.dot_dimension_numbers<[1], [0], [0], [1], [0, 0, 1, 1], [], []>} : vector<64x64xf32>, vector<64x32xf32>, vector<64x32xf32> -> vector<64x32xf32>
    %79 = arith.mulf %78, %62 : vector<64x32xf32>
    %cst_54 = arith.constant dense<0.000000e+00> : vector<64x64xf32>
    %80 = tpu.matmul %4, %64, %cst_54 {dimension_numbers = #tpu.dot_dimension_numbers<[1], [1], [0], [0], [0, 0, 1, 0], [], []>} : vector<64x32xf32>, vector<64x32xf32>, vector<64x64xf32> -> vector<64x64xf32>
    %c0_55 = arith.constant 0 : index
    %c0_56 = arith.constant 0 : index
    %81 = vector.load %arg10[%c0_55, %c0_56] : memref<64x64xf32, #tpu.memory_space<vmem>>, vector<64x64xf32>
    %82 = arith.addf %80, %81 : vector<64x64xf32>
    %cst_57 = arith.constant dense<0xFF800000> : vector<64xf32>
    %83 = vector.multi_reduction <maximumf>, %82, %cst_57 [1] : vector<64x64xf32> to vector<64xf32>
    %84 = vector.shape_cast %83 : vector<64xf32> to vector<64x1xf32>
    %85 = vector.broadcast %84 : vector<64x1xf32> to vector<64x64xf32>
    %86 = arith.subf %82, %85 : vector<64x64xf32>
    %87 = math.exp %86 : vector<64x64xf32>
    %c0_58 = arith.constant 0 : index
    %c0_59 = arith.constant 0 : index
    %88 = vector.load %arg8[%c0_58, %c0_59] : memref<64x64xf32, #tpu.memory_space<vmem>>, vector<64x64xf32>
    %cst_60 = arith.constant dense<0.000000e+00> : vector<64x64xf32>
    %89 = tpu.matmul %87, %88, %cst_60 {dimension_numbers = #tpu.dot_dimension_numbers<[1], [0], [0], [1], [0, 0, 1, 1], [], []>} : vector<64x64xf32>, vector<64x64xf32>, vector<64x64xf32> -> vector<64x64xf32>
    %90 = tpu.reciprocal %89 {approx = true} : vector<64x64xf32> -> vector<64x64xf32>
    %91 = arith.mulf %87, %90 : vector<64x64xf32>
    %cst_61 = arith.constant dense<0.000000e+00> : vector<64x32xf32>
    %92 = tpu.matmul %91, %79, %cst_61 {dimension_numbers = #tpu.dot_dimension_numbers<[1], [0], [0], [1], [0, 0, 1, 1], [], []>} : vector<64x64xf32>, vector<64x32xf32>, vector<64x32xf32> -> vector<64x32xf32>
    %93 = arith.addf %92, %59 : vector<64x32xf32>
    %c0_62 = arith.constant 0 : index
    %c0_63 = arith.constant 0 : index
    %94 = vector.load %arg3[%c0_62, %c0_63] : memref<32x32xf32, #tpu.memory_space<vmem>>, vector<32x32xf32>
    %cst_64 = arith.constant dense<0.000000e+00> : vector<64x32xf32>
    %95 = tpu.matmul %93, %94, %cst_64 {dimension_numbers = #tpu.dot_dimension_numbers<[1], [0], [0], [1], [0, 0, 1, 1], [], []>} : vector<64x32xf32>, vector<32x32xf32>, vector<64x32xf32> -> vector<64x32xf32>
    %c0_65 = arith.constant 0 : index
    %c0_66 = arith.constant 0 : index
    %96 = vector.load %arg4[%c0_65, %c0_66] : memref<1x32xf32, #tpu.memory_space<vmem>>, vector<1x32xf32>
    %97 = vector.broadcast %96 : vector<1x32xf32> to vector<64x32xf32>
    %98 = arith.addf %95, %97 : vector<64x32xf32>
    %c0_67 = arith.constant 0 : index
    %c0_68 = arith.constant 0 : index
    %c0_69 = arith.constant 0 : index
    %99 = vector.load %arg12[%c0_67, %c0_68, %c0_69] : memref<1x64x32xf32, #tpu.memory_space<vmem>>, vector<1x64x32xf32>
    %100 = vector.shape_cast %99 : vector<1x64x32xf32> to vector<64x32xf32>
    %101 = vector.shape_cast %98 : vector<64x32xf32> to vector<1x64x32xf32>
    tpu.vector_store %arg12[%c0_67, %c0_68, %c0_69], %101 {strides = array<i32>} : memref<1x64x32xf32, #tpu.memory_space<vmem>>, vector<1x64x32xf32>,
    return
  }
  func.func @transform_0(%arg0: i32) -> (i32, i32, i32) {
    %c0_i32 = arith.constant 0 : i32
    %c0_i32_0 = arith.constant 0 : i32
    %c0_i32_1 = arith.constant 0 : i32
    return %arg0, %c0_i32, %c0_i32_0 : i32, i32, i32
  }
  func.func @transform_1(%arg0: i32) -> (i32, i32) {
    %c0_i32 = arith.constant 0 : i32
    %c0_i32_0 = arith.constant 0 : i32
    %c0_i32_1 = arith.constant 0 : i32
    return %c0_i32, %c0_i32_0 : i32, i32
  }
  func.func @transform_2(%arg0: i32) -> (i32, i32) {
    %c0_i32 = arith.constant 0 : i32
    %c0_i32_0 = arith.constant 0 : i32
    %c0_i32_1 = arith.constant 0 : i32
    return %c0_i32, %c0_i32_0 : i32, i32
  }
  func.func @transform_3(%arg0: i32) -> (i32, i32) {
    %c0_i32 = arith.constant 0 : i32
    %c0_i32_0 = arith.constant 0 : i32
    %c0_i32_1 = arith.constant 0 : i32
    return %c0_i32, %c0_i32_0 : i32, i32
  }
  func.func @transform_4(%arg0: i32) -> (i32, i32) {
    %c0_i32 = arith.constant 0 : i32
    %c0_i32_0 = arith.constant 0 : i32
    %c0_i32_1 = arith.constant 0 : i32
    return %c0_i32, %c0_i32_0 : i32, i32
  }
  func.func @transform_5(%arg0: i32) -> (i32, i32) {
    %c0_i32 = arith.constant 0 : i32
    %c0_i32_0 = arith.constant 0 : i32
    %c0_i32_1 = arith.constant 0 : i32
    return %c0_i32, %c0_i32_0 : i32, i32
  }
  func.func @transform_6(%arg0: i32) -> (i32, i32) {
    %c0_i32 = arith.constant 0 : i32
    %c0_i32_0 = arith.constant 0 : i32
    %c0_i32_1 = arith.constant 0 : i32
    return %c0_i32, %c0_i32_0 : i32, i32
  }
  func.func @transform_7(%arg0: i32) -> (i32, i32) {
    %c0_i32 = arith.constant 0 : i32
    %c0_i32_0 = arith.constant 0 : i32
    %c0_i32_1 = arith.constant 0 : i32
    return %c0_i32, %c0_i32_0 : i32, i32
  }
  func.func @transform_8(%arg0: i32) -> (i32, i32) {
    %c0_i32 = arith.constant 0 : i32
    %c0_i32_0 = arith.constant 0 : i32
    %c0_i32_1 = arith.constant 0 : i32
    return %c0_i32, %c0_i32_0 : i32, i32
  }
  func.func @transform_9(%arg0: i32) -> (i32, i32) {
    %c0_i32 = arith.constant 0 : i32
    %c0_i32_0 = arith.constant 0 : i32
    %c0_i32_1 = arith.constant 0 : i32
    return %c0_i32, %c0_i32_0 : i32, i32
  }
  func.func @transform_10(%arg0: i32) -> (i32, i32, i32) {
    %c0_i32 = arith.constant 0 : i32
    %c0_i32_0 = arith.constant 0 : i32
    %c0_i32_1 = arith.constant 0 : i32
    %c0_i32_2 = arith.constant 0 : i32
    return %c0_i32, %c0_i32_0, %c0_i32_1 : i32, i32, i32
  }
  func.func @transform_11(%arg0: i32) -> (i32, i32, i32) {
    %c0_i32 = arith.constant 0 : i32
    %c0_i32_0 = arith.constant 0 : i32
    %c0_i32_1 = arith.constant 0 : i32
    return %arg0, %c0_i32, %c0_i32_0 : i32, i32, i32
  }
}

</mosaic_0001>

<llo_original>
// kernel: tpu_custom_call.1
$region0: #{tpu_custom_call.1}
  #allocation0 [shape = 'u32[]', space=smem, size = 0x4, offset = 0x4, fixed_abs, tag = 'smem constant byte address 0x4 - core index']
  #allocation1 [shape = 'u32[72,128]{1,0:T(1,128)}', space=vmem, size = 0x9000, scoped, tag = 'internal scratch']
  #allocation2 [shape = 'f32[96,32]{1,0:T(8,128)}', space=vmem, size = 0xc000, scoped, tag = 'scratch operand']
  %s0 = inlined_call_operand.vmem [shape: f32[2,64,32], index: 0, kind: input, shape index: {}]
  %s1 = inlined_call_operand.vmem [shape: f32[32,96], index: 1, kind: input, shape index: {}]
  %s2 = inlined_call_operand.vmem [shape: f32[32,32], index: 2, kind: input, shape index: {}]
  %s3 = inlined_call_operand.vmem [shape: f32[1,32], index: 3, kind: input, shape index: {}]
  %s4 = inlined_call_operand.vmem [shape: f32[1,32], index: 4, kind: input, shape index: {}]
  %s5 = inlined_call_operand.vmem [shape: f32[16,64], index: 5, kind: input, shape index: {}]
  %s6 = inlined_call_operand.vmem [shape: f32[64,32], index: 6, kind: input, shape index: {}]
  %s7 = inlined_call_operand.vmem [shape: f32[64,64], index: 7, kind: input, shape index: {}]
  %s8 = inlined_call_operand.vmem [shape: f32[64,64], index: 8, kind: input, shape index: {}]
  %s9 = inlined_call_operand.vmem [shape: f32[64,64], index: 9, kind: input, shape index: {}]
  %s10 = inlined_call_operand.vmem [shape: f32[9,64,32], index: 10, kind: input, shape index: {}]
  %s11 = inlined_call_operand.vmem [shape: f32[2,64,32], index: 11, kind: output, shape index: {}]
  %s12 = sld [smem:[#allocation0]]
  $region77: #{tpu_custom_call.1} parent=0
    _
  %s14 = ssub.s32 1, %s12
  %s15 = scalar_select 0, %s14, %s12
  loop: start=0, step=1, limit=4
  $region2: #{tpu_custom_call.1} parent=0 // loop_pre_header
    _
  $region3: #{tpu_custom_call.1} parent=0 // loop_header
    %s17 = sphi 0, %s21
    %p18 = scmp.ge.s32.totalorder %s17, 4
    %s27 = sphi 0, %s29
    %s30 = sphi 0, %s27
    %s31 = sphi 0, %s30
    %s47 = sphi 0, %s31
    %s51 = sphi 0, %s51
    %s53 = sphi 0, %s51
    %s54 = sphi 0, %s53
    %s68 = sphi 0, %s54
    %s72 = sphi 0, %s72
    %s74 = sphi 0, %s72
    %s75 = sphi 0, %s74
    %s89 = sphi 0, %s75
    %s93 = sphi 0, %s93
    %s95 = sphi 0, %s93
    %s96 = sphi 0, %s95
    %s110 = sphi 0, %s96
    %s114 = sphi 0, %s114
    %s116 = sphi 0, %s114
    %s117 = sphi 0, %s116
    %s131 = sphi 0, %s117
    %s135 = sphi 0, %s135
    %s137 = sphi 0, %s135
    %s138 = sphi 0, %s137
    %s152 = sphi 0, %s138
    %s156 = sphi 0, %s156
    %s158 = sphi 0, %s156
    %s159 = sphi 0, %s158
    %s173 = sphi 0, %s159
    %s177 = sphi 0, %s177
    %s179 = sphi 0, %s177
    %s180 = sphi 0, %s179
    %s194 = sphi 0, %s180
    %s198 = sphi 0, %s198
    %s200 = sphi 0, %s198
    %s201 = sphi 0, %s200
    %s215 = sphi 0, %s201
    %s219 = sphi 0, %s219
    %s221 = sphi 0, %s219
    %s222 = sphi 0, %s221
    %s236 = sphi 0, %s222
    %s240 = sphi 0, %s240
    %s242 = sphi 0, %s240
    %s243 = sphi 0, %s242
    %s257 = sphi 0, %s243
    %s263 = sphi 0, %s265
    %s266 = sphi 0, %s263
    %s267 = sphi 0, %s266
    %s283 = sphi 0, %s267
  $region4: #{tpu_custom_call.1} parent=0 // loop_header_branch
    %20 = sbr.rel (%p18) target = $region8
  $region5: #{tpu_custom_call.1} parent=0 // loop_body
    %s22 = ssub.s32 %s17, 1
    %s23 = ssub.s32 %s17, 2
    %s24 = sadd.s32 %s17, 1
    %s25 = ssub.s32 %s17, %s24
    %p26 = scmp.eq.s32.totalorder %s25, 0
    %s28 = sadd.s32 %s27, 1
    %s29 = scalar_select %p26, %s27, %s28
    %p32 = pneg %p26
    %p33 = scmp.eq.s32.totalorder %s17, 1
    %p34 = por %p32, %p33
    %p35 = scmp.ne.s32.totalorder %s27, %s30
    %p36 = scmp.eq.s32.totalorder %s17, 0
    %p37 = por %p35, %p36
    %p38 = scmp.ne.s32.totalorder %s27, %s30
    %p39 = scmp.eq.s32.totalorder %s22, 1
    %p40 = por %p38, %p39
    %p41 = scmp.ne.s32.totalorder %s30, %s31
    %p42 = scmp.eq.s32.totalorder %s22, 0
    %p43 = por %p41, %p42
    %p44 = scmp.ne.s32.totalorder %s30, %s31
    %p45 = scmp.eq.s32.totalorder %s23, 1
    %p46 = por %p44, %p45
    %p48 = scmp.ne.s32.totalorder %s31, %s47
    %p49 = scmp.eq.s32.totalorder %s23, 0
    %p50 = por %p48, %p49
    %s52 = sadd.s32 %s51, 1
    %p55 = scmp.eq.s32.totalorder %s17, 1
    %p56 = scmp.ne.s32.totalorder %s51, %s53
    %p57 = scmp.eq.s32.totalorder %s17, 0
    %p58 = por %p56, %p57
    %p59 = scmp.ne.s32.totalorder %s51, %s53
    %p60 = scmp.eq.s32.totalorder %s22, 1
    %p61 = por %p59, %p60
    %p62 = scmp.ne.s32.totalorder %s53, %s54
    %p63 = scmp.eq.s32.totalorder %s22, 0
    %p64 = por %p62, %p63
    %p65 = scmp.ne.s32.totalorder %s53, %s54
    %p66 = scmp.eq.s32.totalorder %s23, 1
    %p67 = por %p65, %p66
    %p69 = scmp.ne.s32.totalorder %s54, %s68
    %p70 = scmp.eq.s32.totalorder %s23, 0
    %p71 = por %p69, %p70
    %s73 = sadd.s32 %s72, 1
    %p76 = scmp.eq.s32.totalorder %s17, 1
    %p77 = scmp.ne.s32.totalorder %s72, %s74
    %p78 = scmp.eq.s32.totalorder %s17, 0
    %p79 = por %p77, %p78
    %p80 = scmp.ne.s32.totalorder %s72, %s74
    %p81 = scmp.eq.s32.totalorder %s22, 1
    %p82 = por %p80, %p81
    %p83 = scmp.ne.s32.totalorder %s74, %s75
    %p84 = scmp.eq.s32.totalorder %s22, 0
    %p85 = por %p83, %p84
    %p86 = scmp.ne.s32.totalorder %s74, %s75
    %p87 = scmp.eq.s32.totalorder %s23, 1
    %p88 = por %p86, %p87
    %p90 = scmp.ne.s32.totalorder %s75, %s89
    %p91 = scmp.eq.s32.totalorder %s23, 0
    %p92 = por %p90, %p91
    %s94 = sadd.s32 %s93, 1
    %p97 = scmp.eq.s32.totalorder %s17, 1
    %p98 = scmp.ne.s32.totalorder %s93, %s95
    %p99 = scmp.eq.s32.totalorder %s17, 0
    %p100 = por %p98, %p99
    %p101 = scmp.ne.s32.totalorder %s93, %s95
    %p102 = scmp.eq.s32.totalorder %s22, 1
    %p103 = por %p101, %p102
    %p104 = scmp.ne.s32.totalorder %s95, %s96
    %p105 = scmp.eq.s32.totalorder %s22, 0
    %p106 = por %p104, %p105
    %p107 = scmp.ne.s32.totalorder %s95, %s96
    %p108 = scmp.eq.s32.totalorder %s23, 1
    %p109 = por %p107, %p108
    %p111 = scmp.ne.s32.totalorder %s96, %s110
    %p112 = scmp.eq.s32.totalorder %s23, 0
    %p113 = por %p111, %p112
    %s115 = sadd.s32 %s114, 1
    %p118 = scmp.eq.s32.totalorder %s17, 1
    %p119 = scmp.ne.s32.totalorder %s114, %s116
    %p120 = scmp.eq.s32.totalorder %s17, 0
    %p121 = por %p119, %p120
    %p122 = scmp.ne.s32.totalorder %s114, %s116
    %p123 = scmp.eq.s32.totalorder %s22, 1
    %p124 = por %p122, %p123
    %p125 = scmp.ne.s32.totalorder %s116, %s117
    %p126 = scmp.eq.s32.totalorder %s22, 0
    %p127 = por %p125, %p126
    %p128 = scmp.ne.s32.totalorder %s116, %s117
    %p129 = scmp.eq.s32.totalorder %s23, 1
    %p130 = por %p128, %p129
    %p132 = scmp.ne.s32.totalorder %s117, %s131
    %p133 = scmp.eq.s32.totalorder %s23, 0
    %p134 = por %p132, %p133
    %s136 = sadd.s32 %s135, 1
    %p139 = scmp.eq.s32.totalorder %s17, 1
    %p140 = scmp.ne.s32.totalorder %s135, %s137
    %p141 = scmp.eq.s32.totalorder %s17, 0
    %p142 = por %p140, %p141
    %p143 = scmp.ne.s32.totalorder %s135, %s137
    %p144 = scmp.eq.s32.totalorder %s22, 1
    %p145 = por %p143, %p144
    %p146 = scmp.ne.s32.totalorder %s137, %s138
    %p147 = scmp.eq.s32.totalorder %s22, 0
    %p148 = por %p146, %p147
    %p149 = scmp.ne.s32.totalorder %s137, %s138
    %p150 = scmp.eq.s32.totalorder %s23, 1
    %p151 = por %p149, %p150
    %p153 = scmp.ne.s32.totalorder %s138, %s152
    %p154 = scmp.eq.s32.totalorder %s23, 0
    %p155 = por %p153, %p154
    %s157 = sadd.s32 %s156, 1
    %p160 = scmp.eq.s32.totalorder %s17, 1
    %p161 = scmp.ne.s32.totalorder %s156, %s158
    %p162 = scmp.eq.s32.totalorder %s17, 0
    %p163 = por %p161, %p162
    %p164 = scmp.ne.s32.totalorder %s156, %s158
    %p165 = scmp.eq.s32.totalorder %s22, 1
    %p166 = por %p164, %p165
    %p167 = scmp.ne.s32.totalorder %s158, %s159
    %p168 = scmp.eq.s32.totalorder %s22, 0
    %p169 = por %p167, %p168
    %p170 = scmp.ne.s32.totalorder %s158, %s159
    %p171 = scmp.eq.s32.totalorder %s23, 1
    %p172 = por %p170, %p171
    %p174 = scmp.ne.s32.totalorder %s159, %s173
    %p175 = scmp.eq.s32.totalorder %s23, 0
    %p176 = por %p174, %p175
    %s178 = sadd.s32 %s177, 1
    %p181 = scmp.eq.s32.totalorder %s17, 1
    %p182 = scmp.ne.s32.totalorder %s177, %s179
    %p183 = scmp.eq.s32.totalorder %s17, 0
    %p184 = por %p182, %p183
    %p185 = scmp.ne.s32.totalorder %s177, %s179
    %p186 = scmp.eq.s32.totalorder %s22, 1
    %p187 = por %p185, %p186
    %p188 = scmp.ne.s32.totalorder %s179, %s180
    %p189 = scmp.eq.s32.totalorder %s22, 0
    %p190 = por %p188, %p189
    %p191 = scmp.ne.s32.totalorder %s179, %s180
    %p192 = scmp.eq.s32.totalorder %s23, 1
    %p193 = por %p191, %p192
    %p195 = scmp.ne.s32.totalorder %s180, %s194
    %p196 = scmp.eq.s32.totalorder %s23, 0
    %p197 = por %p195, %p196
    %s199 = sadd.s32 %s198, 1
    %p202 = scmp.eq.s32.totalorder %s17, 1
    %p203 = scmp.ne.s32.totalorder %s198, %s200
    %p204 = scmp.eq.s32.totalorder %s17, 0
    %p205 = por %p203, %p204
    %p206 = scmp.ne.s32.totalorder %s198, %s200
    %p207 = scmp.eq.s32.totalorder %s22, 1
    %p208 = por %p206, %p207
    %p209 = scmp.ne.s32.totalorder %s200, %s201
    %p210 = scmp.eq.s32.totalorder %s22, 0
    %p211 = por %p209, %p210
    %p212 = scmp.ne.s32.totalorder %s200, %s201
    %p213 = scmp.eq.s32.totalorder %s23, 1
    %p214 = por %p212, %p213
    %p216 = scmp.ne.s32.totalorder %s201, %s215
    %p217 = scmp.eq.s32.totalorder %s23, 0
    %p218 = por %p216, %p217
    %s220 = sadd.s32 %s219, 1
    %p223 = scmp.eq.s32.totalorder %s17, 1
    %p224 = scmp.ne.s32.totalorder %s219, %s221
    %p225 = scmp.eq.s32.totalorder %s17, 0
    %p226 = por %p224, %p225
    %p227 = scmp.ne.s32.totalorder %s219, %s221
    %p228 = scmp.eq.s32.totalorder %s22, 1
    %p229 = por %p227, %p228
    %p230 = scmp.ne.s32.totalorder %s221, %s222
    %p231 = scmp.eq.s32.totalorder %s22, 0
    %p232 = por %p230, %p231
    %p233 = scmp.ne.s32.totalorder %s221, %s222
    %p234 = scmp.eq.s32.totalorder %s23, 1
    %p235 = por %p233, %p234
    %p237 = scmp.ne.s32.totalorder %s222, %s236
    %p238 = scmp.eq.s32.totalorder %s23, 0
    %p239 = por %p237, %p238
    %s241 = sadd.s32 %s240, 1
    %p244 = scmp.eq.s32.totalorder %s17, 1
    %p245 = scmp.ne.s32.totalorder %s240, %s242
    %p246 = scmp.eq.s32.totalorder %s17, 0
    %p247 = por %p245, %p246
    %p248 = scmp.ne.s32.totalorder %s240, %s242
    %p249 = scmp.eq.s32.totalorder %s22, 1
    %p250 = por %p248, %p249
    %p251 = scmp.ne.s32.totalorder %s242, %s243
    %p252 = scmp.eq.s32.totalorder %s22, 0
    %p253 = por %p251, %p252
    %p254 = scmp.ne.s32.totalorder %s242, %s243
    %p255 = scmp.eq.s32.totalorder %s23, 1
    %p256 = por %p254, %p255
    %p258 = scmp.ne.s32.totalorder %s243, %s257
    %p259 = scmp.eq.s32.totalorder %s23, 0
    %p260 = por %p258, %p259
    %s261 = ssub.s32 %s17, %s24
    %p262 = scmp.eq.s32.totalorder %s261, 0
    %s264 = sadd.s32 %s263, 1
    %s265 = scalar_select %p262, %s263, %s264
    %p268 = pneg %p262
    %p269 = scmp.eq.s32.totalorder %s17, 1
    %p270 = por %p268, %p269
    %p271 = scmp.ne.s32.totalorder %s263, %s266
    %p272 = scmp.eq.s32.totalorder %s17, 0
    %p273 = por %p271, %p272
    %p274 = scmp.ne.s32.totalorder %s263, %s266
    %p275 = scmp.eq.s32.totalorder %s22, 1
    %p276 = por %p274, %p275
    %p277 = scmp.ne.s32.totalorder %s266, %s267
    %p278 = scmp.eq.s32.totalorder %s22, 0
    %p279 = por %p277, %p278
    %p280 = scmp.ne.s32.totalorder %s266, %s267
    %p281 = scmp.eq.s32.totalorder %s23, 1
    %p282 = por %p280, %p281
    %p284 = scmp.ne.s32.totalorder %s267, %s283
    %p285 = scmp.eq.s32.totalorder %s23, 0
    %p286 = por %p284, %p285
    %p287 = scmp.le.s32.totalorder 1, %s17
    %p288 = scmp.lt.s32.totalorder %s17, 3
    %p289 = pnand %p287, %p288
    %p290 = pneg %p289
    // Predicated region
    $region9: #{tpu_custom_call.1} parent=5 // pred_check
      _
    $region10: #{tpu_custom_call.1} parent=5 // pred_check_branch
      %292 = sbr.rel (%p289) target = $region12
    $region11: #{tpu_custom_call.1} parent=5 // pred_region
      %s293 = ssub.s32 %s17, 1
      // Predicated region
      $region13: #{tpu_custom_call.1} parent=11 // pred_check
        %p294 = pneg %p64
      $region14: #{tpu_custom_call.1} parent=11 // pred_check_branch
        %296 = sbr.rel (%p294) target = $region16
      $region15: #{tpu_custom_call.1} parent=11 // pred_region
        _
      $region16: #{tpu_custom_call.1} parent=11 // pred_fallthru
        _
      // Predicated region
      $region17: #{tpu_custom_call.1} parent=11 // pred_check
        %p297 = pneg %p85
      $region18: #{tpu_custom_call.1} parent=11 // pred_check_branch
        %299 = sbr.rel (%p297) target = $region20
      $region19: #{tpu_custom_call.1} parent=11 // pred_region
        _
      $region20: #{tpu_custom_call.1} parent=11 // pred_fallthru
        _
      // Predicated region
      $region21: #{tpu_custom_call.1} parent=11 // pred_check
        %p300 = pneg %p106
      $region22: #{tpu_custom_call.1} parent=11 // pred_check_branch
        %302 = sbr.rel (%p300) target = $region24
      $region23: #{tpu_custom_call.1} parent=11 // pred_region
        _
      $region24: #{tpu_custom_call.1} parent=11 // pred_fallthru
        _
      // Predicated region
      $region25: #{tpu_custom_call.1} parent=11 // pred_check
        %p303 = pneg %p127
      $region26: #{tpu_custom_call.1} parent=11 // pred_check_branch
        %305 = sbr.rel (%p303) target = $region28
      $region27: #{tpu_custom_call.1} parent=11 // pred_region
        _
      $region28: #{tpu_custom_call.1} parent=11 // pred_fallthru
        _
      // Predicated region
      $region29: #{tpu_custom_call.1} parent=11 // pred_check
        %p306 = pneg %p148
      $region30: #{tpu_custom_call.1} parent=11 // pred_check_branch
        %308 = sbr.rel (%p306) target = $region32
      $region31: #{tpu_custom_call.1} parent=11 // pred_region
        _
      $region32: #{tpu_custom_call.1} parent=11 // pred_fallthru
        _
      // Predicated region
      $region33: #{tpu_custom_call.1} parent=11 // pred_check
        %p309 = pneg %p169
      $region34: #{tpu_custom_call.1} parent=11 // pred_check_branch
        %311 = sbr.rel (%p309) target = $region36
      $region35: #{tpu_custom_call.1} parent=11 // pred_region
        _
      $region36: #{tpu_custom_call.1} parent=11 // pred_fallthru
        _
      // Predicated region
      $region37: #{tpu_custom_call.1} parent=11 // pred_check
        %p312 = pneg %p190
      $region38: #{tpu_custom_call.1} parent=11 // pred_check_branch
        %314 = sbr.rel (%p312) target = $region40
      $region39: #{tpu_custom_call.1} parent=11 // pred_region
        _
      $region40: #{tpu_custom_call.1} parent=11 // pred_fallthru
        _
      // Predicated region
      $region41: #{tpu_custom_call.1} parent=11 // pred_check
        %p315 = pneg %p211
      $region42: #{tpu_custom_call.1} parent=11 // pred_check_branch
        %317 = sbr.rel (%p315) target = $region44
      $region43: #{tpu_custom_call.1} parent=11 // pred_region
        _
      $region44: #{tpu_custom_call.1} parent=11 // pred_fallthru
        _
      // Predicated region
      $region45: #{tpu_custom_call.1} parent=11 // pred_check
        %p318 = pneg %p232
      $region46: #{tpu_custom_call.1} parent=11 // pred_check_branch
        %320 = sbr.rel (%p318) target = $region48
      $region47: #{tpu_custom_call.1} parent=11 // pred_region
        _
      $region48: #{tpu_custom_call.1} parent=11 // pred_fallthru
        _
      // Predicated region
      $region49: #{tpu_custom_call.1} parent=11 // pred_check
        %p321 = pneg %p253
      $region50: #{tpu_custom_call.1} parent=11 // pred_check_branch
        %323 = sbr.rel (%p321) target = $region52
      $region51: #{tpu_custom_call.1} parent=11 // pred_region
        _
      $region52: #{tpu_custom_call.1} parent=11 // pred_fallthru
        _
    $region12: #{tpu_custom_call.1} parent=5 // pred_fallthru
      _
    %p324 = scmp.lt.s32.totalorder %s17, 2
    // Predicated region
    $region53: #{tpu_custom_call.1} parent=5 // pred_check
      %p325 = pneg %p324
    $region54: #{tpu_custom_call.1} parent=5 // pred_check_branch
      %327 = sbr.rel (%p325) target = $region56
    $region55: #{tpu_custom_call.1} parent=5 // pred_region
      // Predicated region
      $region57: #{tpu_custom_call.1} parent=55 // pred_check
        %p328 = pneg %p37
      $region58: #{tpu_custom_call.1} parent=55 // pred_check_branch
        %330 = sbr.rel (%p328) target = $region60
      $region59: #{tpu_custom_call.1} parent=55 // pred_region
        %p331 = scmp.lt.s32.totalorder %s17, 1
        %s332 = scalar_select %p331, %s17, 1
        %s333 = smul.addr %s332, 8
        %s334 = smul.addr %s333, 8
        %s335 = scalar_lea.vmem %s0, %s334
      $region60: #{tpu_custom_call.1} parent=55 // pred_fallthru
        _
    $region56: #{tpu_custom_call.1} parent=5 // pred_fallthru
      _
    %p336 = scmp.le.s32.totalorder 1, %s17
    %p337 = scmp.lt.s32.totalorder %s17, 3
    %p338 = pnand %p336, %p337
    %p339 = pneg %p338
    // Predicated region
    $region61: #{tpu_custom_call.1} parent=5 // pred_check
      _
    $region62: #{tpu_custom_call.1} parent=5 // pred_check_branch
      %341 = sbr.rel (%p338) target = $region64
    $region63: #{tpu_custom_call.1} parent=5 // pred_region
      %s342 = ssub.s32 %s17, 1
      %p343 = scmp.lt.s32.totalorder %s22, 1
      %s344 = scalar_select %p343, %s22, 1
      %s345 = smul.addr %s344, 8
      %s346 = smul.addr %s345, 8
      %s347 = scalar_lea.vmem %s0, %s346
      %p348 = pneg %p43
      %p349 = pneg %p40
      %p350 = pneg %p64
      %p351 = pneg %p61
      %p352 = pneg %p85
      %p353 = pneg %p82
      %p354 = pneg %p106
      %p355 = pneg %p103
      %p356 = pneg %p127
      %p357 = pneg %p124
      %p358 = pneg %p148
      %p359 = pneg %p145
      %p360 = pneg %p169
      %p361 = pneg %p166
      %p362 = pneg %p190
      %p363 = pneg %p187
      %p364 = pneg %p211
      %p365 = pneg %p208
      %p366 = pneg %p232
      %p367 = pneg %p229
      %p368 = pneg %p253
      %p369 = pneg %p250
      %p370 = pneg %p279
      %p371 = pneg %p276
      %p372 = scmp.lt.s32.totalorder %s22, 1
      %s373 = scalar_select %p372, %s22, 1
      %s374 = smul.addr %s373, 8
      %s375 = smul.addr %s374, 8
      %s376 = scalar_lea.vmem %s11, %s375
      %p377 = scmp.lt.s32.totalorder %s22, 1
      %s378 = scalar_select %p377, %s22, 1
      %s379 = smul.addr %s378, 8
      %s380 = smul.addr %s379, 8
      %s381 = scalar_lea.vmem %s0, %s380
      %p382 = scmp.lt.s32.totalorder %s22, 1
      %s383 = scalar_select %p382, %s22, 1
      %s384 = smul.addr %s383, 8
      %s385 = smul.addr %s384, 8
      %s386 = scalar_lea.vmem %s11, %s385
      %v387 = vld [vmem:[%s381] sm:$0xff]
      %v388 = vld [vmem:[%s381 + $0x8] sm:$0xff]
      %v389 = vld [vmem:[%s381 + $0x10] sm:$0xff]
      %v390 = vld [vmem:[%s381 + $0x18] sm:$0xff]
      %v391 = vld [vmem:[%s381 + $0x20] sm:$0xff]
      %v392 = vld [vmem:[%s381 + $0x28] sm:$0xff]
      %v393 = vld [vmem:[%s381 + $0x30] sm:$0xff]
      %v394 = vld [vmem:[%s381 + $0x38] sm:$0xff]
      %v395 = vld [vmem:[%s1] sm:$0xff]
      %v396 = vld [vmem:[%s1 + $0x8] sm:$0xff]
      %v397 = vld [vmem:[%s1 + $0x10] sm:$0xff]
      %v398 = vld [vmem:[%s1 + $0x18] sm:$0xff]
      %vm399 = vcmask 261120
      %v401 = vsel %vm399, %v387, 0
      %v404 = vsel %vm399, %v388, 0
      %v407 = vsel %vm399, %v389, 0
      %v410 = vsel %vm399, %v390, 0
      %v413 = vsel %vm399, %v391, 0
      %v416 = vsel %vm399, %v392, 0
      %v419 = vsel %vm399, %v393, 0
      %v422 = vsel %vm399, %v394, 0
      %424 = vmatpush.msra.mxu0 0.0
      %425 = vmatpush.msra.mxu0 0.0
      %426 = vmatpush.msra.mxu0 0.0
      %427 = vmatpush.msra.mxu0 0.0
      %428 = vmatpush.msra.mxu0 0.0
      %429 = vmatpush.msra.mxu0 0.0
      %430 = vmatpush.msra.mxu0 0.0
      %431 = vmatpush.msra.mxu0 0.0
      %432 = vmatpush.msra.mxu0 0.0
      %433 = vmatpush.msra.mxu0 0.0
      %434 = vmatpush.msra.mxu0 0.0
      %435 = vmatpush.msra.mxu0 0.0
      %436 = vmatpush.msra.mxu0 %v398
      %437 = vmatpush.msra.mxu0 %v397
      %438 = vmatpush.msra.mxu0 %v396
      %439 = vmatpush.msra.mxu0 %v395
      %440 = vmatmul.f32.gmra.mxu0 %v401
      %v441 = vpop.f32.mrf.mxu0
      %v442 = vadd.f32 0.0, %v441
      %443 = vmatmul.f32.gmra.mxu0 %v404
      %v444 = vpop.f32.mrf.mxu0
      %v445 = vadd.f32 0.0, %v444
      %446 = vmatmul.f32.gmra.mxu0 %v407
      %v447 = vpop.f32.mrf.mxu0
      %v448 = vadd.f32 0.0, %v447
      %449 = vmatmul.f32.gmra.mxu0 %v410
      %v450 = vpop.f32.mrf.mxu0
      %v451 = vadd.f32 0.0, %v450
      %452 = vmatmul.f32.gmra.mxu0 %v413
      %v453 = vpop.f32.mrf.mxu0
      %v454 = vadd.f32 0.0, %v453
      %455 = vmatmul.f32.gmra.mxu0 %v416
      %v456 = vpop.f32.mrf.mxu0
      %v457 = vadd.f32 0.0, %v456
      %458 = vmatmul.f32.gmra.mxu0 %v419
      %v459 = vpop.f32.mrf.mxu0
      %v460 = vadd.f32 0.0, %v459
      %461 = vmatmul.f32.gmra.mxu0 %v422
      %v462 = vpop.f32.mrf.mxu0
      %v463 = vadd.f32 0.0, %v462
      %464 = vdwg.mxu0
      %465 = vst.msk [vmem:[#allocation2] sm:$0xff] %vm399, 0.0
      %466 = vst.msk [vmem:[#allocation2 + $0x8] sm:$0xff] %vm399, 0.0
      %467 = vst.msk [vmem:[#allocation2 + $0x50] sm:$0xff] %vm399, 0.0
      %468 = vst.msk [vmem:[#allocation2 + $0x58] sm:$0xff] %vm399, 0.0
      %477 = vrot.lane.b32.xlu0 %v442, 64
      %v478 = vpop.permute.xlu0 %477
      %479 = vrot.lane.b32.xlu0 %v445, 64
      %v480 = vpop.permute.xlu0 %479
      %481 = vrot.lane.b32.xlu0 %v448, 64
      %v482 = vpop.permute.xlu0 %481
      %483 = vrot.lane.b32.xlu0 %v451, 64
      %v484 = vpop.permute.xlu0 %483
      %485 = vrot.lane.b32.xlu0 %v454, 64
      %v486 = vpop.permute.xlu0 %485
      %487 = vrot.lane.b32.xlu0 %v457, 64
      %v488 = vpop.permute.xlu0 %487
      %489 = vrot.lane.b32.xlu0 %v460, 64
      %v490 = vpop.permute.xlu0 %489
      %491 = vrot.lane.b32.xlu0 %v463, 64
      %v492 = vpop.permute.xlu0 %491
      %501 = vst.msk [vmem:[#allocation2 + $0x10] sm:$0xff] %vm399, %v478
      %502 = vst.msk [vmem:[#allocation2 + $0x18] sm:$0xff] %vm399, %v480
      %503 = vst.msk [vmem:[#allocation2 + $0x20] sm:$0xff] %vm399, %v482
      %504 = vst.msk [vmem:[#allocation2 + $0x28] sm:$0xff] %vm399, %v484
      %505 = vst.msk [vmem:[#allocation2 + $0x30] sm:$0xff] %vm399, %v486
      %506 = vst.msk [vmem:[#allocation2 + $0x38] sm:$0xff] %vm399, %v488
      %507 = vst.msk [vmem:[#allocation2 + $0x40] sm:$0xff] %vm399, %v490
      %508 = vst.msk [vmem:[#allocation2 + $0x48] sm:$0xff] %vm399, %v492
      %v509 = vld [vmem:[%s4] sm:$0x1]
      %v511 = vperm.slane %v509, 0
      %v513 = vld [vmem:[#allocation2 + $0x7] sm:$0xff]
      %v514 = vld [vmem:[#allocation2 + $0xf] sm:$0xff]
      %v515 = vld [vmem:[#allocation2 + $0x17] sm:$0xff]
      %v516 = vld [vmem:[#allocation2 + $0x1f] sm:$0xff]
      %v517 = vld [vmem:[#allocation2 + $0x27] sm:$0xff]
      %v518 = vld [vmem:[#allocation2 + $0x2f] sm:$0xff]
      %v519 = vld [vmem:[#allocation2 + $0x37] sm:$0xff]
      %v520 = vld [vmem:[#allocation2 + $0x3f] sm:$0xff]
      %v521 = vld [vmem:[%s10] sm:$0xff]
      %v522 = vld [vmem:[%s10 + $0x8] sm:$0xff]
      %v523 = vld [vmem:[%s10 + $0x10] sm:$0xff]
      %v524 = vld [vmem:[%s10 + $0x18] sm:$0xff]
      %v525 = vld [vmem:[%s10 + $0x20] sm:$0xff]
      %v526 = vld [vmem:[%s10 + $0x28] sm:$0xff]
      %v527 = vld [vmem:[%s10 + $0x30] sm:$0xff]
      %v528 = vld [vmem:[%s10 + $0x38] sm:$0xff]
      %v529 = vmul.f32 %v513, %v521
      %v530 = vmul.f32 %v514, %v522
      %v531 = vmul.f32 %v515, %v523
      %v532 = vmul.f32 %v516, %v524
      %v533 = vmul.f32 %v517, %v525
      %v534 = vmul.f32 %v518, %v526
      %v535 = vmul.f32 %v519, %v527
      %v536 = vmul.f32 %v520, %v528
      %v537 = vadd.f32 %v511, %v529
      %v538 = vadd.f32 %v511, %v530
      %v539 = vadd.f32 %v511, %v531
      %v540 = vadd.f32 %v511, %v532
      %v541 = vadd.f32 %v511, %v533
      %v542 = vadd.f32 %v511, %v534
      %v543 = vadd.f32 %v511, %v535
      %v544 = vadd.f32 %v511, %v536
      %v545 = vld [vmem:[#allocation2 + $0x8] sm:$0xff]
      %v546 = vld [vmem:[#allocation2 + $0x10] sm:$0xff]
      %v547 = vld [vmem:[#allocation2 + $0x18] sm:$0xff]
      %v548 = vld [vmem:[#allocation2 + $0x20] sm:$0xff]
      %v549 = vld [vmem:[#allocation2 + $0x28] sm:$0xff]
      %v550 = vld [vmem:[#allocation2 + $0x30] sm:$0xff]
      %v551 = vld [vmem:[#allocation2 + $0x38] sm:$0xff]
      %v552 = vld [vmem:[#allocation2 + $0x40] sm:$0xff]
      %s553 = scalar_lea.vmem %s10, 64
      %v554 = vld [vmem:[%s553] sm:$0xff]
      %v555 = vld [vmem:[%s553 + $0x8] sm:$0xff]
      %v556 = vld [vmem:[%s553 + $0x10] sm:$0xff]
      %v557 = vld [vmem:[%s553 + $0x18] sm:$0xff]
      %v558 = vld [vmem:[%s553 + $0x20] sm:$0xff]
      %v559 = vld [vmem:[%s553 + $0x28] sm:$0xff]
      %v560 = vld [vmem:[%s553 + $0x30] sm:$0xff]
      %v561 = vld [vmem:[%s553 + $0x38] sm:$0xff]
      %v562 = vmul.f32 %v545, %v554
      %v563 = vmul.f32 %v546, %v555
      %v564 = vmul.f32 %v547, %v556
      %v565 = vmul.f32 %v548, %v557
      %v566 = vmul.f32 %v549, %v558
      %v567 = vmul.f32 %v550, %v559
      %v568 = vmul.f32 %v551, %v560
      %v569 = vmul.f32 %v552, %v561
      %v570 = vadd.f32 %v537, %v562
      %v571 = vadd.f32 %v538, %v563
      %v572 = vadd.f32 %v539, %v564
      %v573 = vadd.f32 %v540, %v565
      %v574 = vadd.f32 %v541, %v566
      %v575 = vadd.f32 %v542, %v567
      %v576 = vadd.f32 %v543, %v568
      %v577 = vadd.f32 %v544, %v569
      %v578 = vld [vmem:[#allocation2 + $0x9] sm:$0xff]
      %v579 = vld [vmem:[#allocation2 + $0x11] sm:$0xff]
      %v580 = vld [vmem:[#allocation2 + $0x19] sm:$0xff]
      %v581 = vld [vmem:[#allocation2 + $0x21] sm:$0xff]
      %v582 = vld [vmem:[#allocation2 + $0x29] sm:$0xff]
      %v583 = vld [vmem:[#allocation2 + $0x31] sm:$0xff]
      %v584 = vld [vmem:[#allocation2 + $0x39] sm:$0xff]
      %v585 = vld [vmem:[#allocation2 + $0x41] sm:$0xff]
      %s586 = scalar_lea.vmem %s10, 128
      %v587 = vld [vmem:[%s586] sm:$0xff]
      %v588 = vld [vmem:[%s586 + $0x8] sm:$0xff]
      %v589 = vld [vmem:[%s586 + $0x10] sm:$0xff]
      %v590 = vld [vmem:[%s586 + $0x18] sm:$0xff]
      %v591 = vld [vmem:[%s586 + $0x20] sm:$0xff]
      %v592 = vld [vmem:[%s586 + $0x28] sm:$0xff]
      %v593 = vld [vmem:[%s586 + $0x30] sm:$0xff]
      %v594 = vld [vmem:[%s586 + $0x38] sm:$0xff]
      %v595 = vmul.f32 %v578, %v587
      %v596 = vmul.f32 %v579, %v588
      %v597 = vmul.f32 %v580, %v589
      %v598 = vmul.f32 %v581, %v590
      %v599 = vmul.f32 %v582, %v591
      %v600 = vmul.f32 %v583, %v592
      %v601 = vmul.f32 %v584, %v593
      %v602 = vmul.f32 %v585, %v594
      %v603 = vadd.f32 %v570, %v595
      %v604 = vadd.f32 %v571, %v596
      %v605 = vadd.f32 %v572, %v597
      %v606 = vadd.f32 %v573, %v598
      %v607 = vadd.f32 %v574, %v599
      %v608 = vadd.f32 %v575, %v600
      %v609 = vadd.f32 %v576, %v601
      %v610 = vadd.f32 %v577, %v602
      %v611 = vld [vmem:[#allocation2 + $0x47] sm:$0xff]
      %s612 = scalar_lea.vmem %s10, 192
      %v613 = vld [vmem:[%s612] sm:$0xff]
      %v614 = vld [vmem:[%s612 + $0x8] sm:$0xff]
      %v615 = vld [vmem:[%s612 + $0x10] sm:$0xff]
      %v616 = vld [vmem:[%s612 + $0x18] sm:$0xff]
      %v617 = vld [vmem:[%s612 + $0x20] sm:$0xff]
      %v618 = vld [vmem:[%s612 + $0x28] sm:$0xff]
      %v619 = vld [vmem:[%s612 + $0x30] sm:$0xff]
      %v620 = vld [vmem:[%s612 + $0x38] sm:$0xff]
      %v621 = vmul.f32 %v514, %v613
      %v622 = vmul.f32 %v515, %v614
      %v623 = vmul.f32 %v516, %v615
      %v624 = vmul.f32 %v517, %v616
      %v625 = vmul.f32 %v518, %v617
      %v626 = vmul.f32 %v519, %v618
      %v627 = vmul.f32 %v520, %v619
      %v628 = vmul.f32 %v611, %v620
      %v629 = vadd.f32 %v603, %v621
      %v630 = vadd.f32 %v604, %v622
      %v631 = vadd.f32 %v605, %v623
      %v632 = vadd.f32 %v606, %v624
      %v633 = vadd.f32 %v607, %v625
      %v634 = vadd.f32 %v608, %v626
      %v635 = vadd.f32 %v609, %v627
      %v636 = vadd.f32 %v610, %v628
      %v637 = vld [vmem:[#allocation2 + $0x48] sm:$0xff]
      %s638 = scalar_lea.vmem %s10, 256
      %v639 = vld [vmem:[%s638] sm:$0xff]
      %v640 = vld [vmem:[%s638 + $0x8] sm:$0xff]
      %v641 = vld [vmem:[%s638 + $0x10] sm:$0xff]
      %v642 = vld [vmem:[%s638 + $0x18] sm:$0xff]
      %v643 = vld [vmem:[%s638 + $0x20] sm:$0xff]
      %v644 = vld [vmem:[%s638 + $0x28] sm:$0xff]
      %v645 = vld [vmem:[%s638 + $0x30] sm:$0xff]
      %v646 = vld [vmem:[%s638 + $0x38] sm:$0xff]
      %v647 = vmul.f32 %v546, %v639
      %v648 = vmul.f32 %v547, %v640
      %v649 = vmul.f32 %v548, %v641
      %v650 = vmul.f32 %v549, %v642
      %v651 = vmul.f32 %v550, %v643
      %v652 = vmul.f32 %v551, %v644
      %v653 = vmul.f32 %v552, %v645
      %v654 = vmul.f32 %v637, %v646
      %v655 = vadd.f32 %v629, %v647
      %v656 = vadd.f32 %v630, %v648
      %v657 = vadd.f32 %v631, %v649
      %v658 = vadd.f32 %v632, %v650
      %v659 = vadd.f32 %v633, %v651
      %v660 = vadd.f32 %v634, %v652
      %v661 = vadd.f32 %v635, %v653
      %v662 = vadd.f32 %v636, %v654
      %v663 = vld [vmem:[#allocation2 + $0x49] sm:$0xff]
      %s664 = scalar_lea.vmem %s10, 320
      %v665 = vld [vmem:[%s664] sm:$0xff]
      %v666 = vld [vmem:[%s664 + $0x8] sm:$0xff]
      %v667 = vld [vmem:[%s664 + $0x10] sm:$0xff]
      %v668 = vld [vmem:[%s664 + $0x18] sm:$0xff]
      %v669 = vld [vmem:[%s664 + $0x20] sm:$0xff]
      %v670 = vld [vmem:[%s664 + $0x28] sm:$0xff]
      %v671 = vld [vmem:[%s664 + $0x30] sm:$0xff]
      %v672 = vld [vmem:[%s664 + $0x38] sm:$0xff]
      %v673 = vmul.f32 %v579, %v665
      %v674 = vmul.f32 %v580, %v666
      %v675 = vmul.f32 %v581, %v667
      %v676 = vmul.f32 %v582, %v668
      %v677 = vmul.f32 %v583, %v669
      %v678 = vmul.f32 %v584, %v670
      %v679 = vmul.f32 %v585, %v671
      %v680 = vmul.f32 %v663, %v672
      %v681 = vadd.f32 %v655, %v673
      %v682 = vadd.f32 %v656, %v674
      %v683 = vadd.f32 %v657, %v675
      %v684 = vadd.f32 %v658, %v676
      %v685 = vadd.f32 %v659, %v677
      %v686 = vadd.f32 %v660, %v678
      %v687 = vadd.f32 %v661, %v679
      %v688 = vadd.f32 %v662, %v680
      %v689 = vld [vmem:[#allocation2 + $0x4f] sm:$0xff]
      %s690 = scalar_lea.vmem %s10, 384
      %v691 = vld [vmem:[%s690] sm:$0xff]
      %v692 = vld [vmem:[%s690 + $0x8] sm:$0xff]
      %v693 = vld [vmem:[%s690 + $0x10] sm:$0xff]
      %v694 = vld [vmem:[%s690 + $0x18] sm:$0xff]
      %v695 = vld [vmem:[%s690 + $0x20] sm:$0xff]
      %v696 = vld [vmem:[%s690 + $0x28] sm:$0xff]
      %v697 = vld [vmem:[%s690 + $0x30] sm:$0xff]
      %v698 = vld [vmem:[%s690 + $0x38] sm:$0xff]
      %v699 = vmul.f32 %v515, %v691
      %v700 = vmul.f32 %v516, %v692
      %v701 = vmul.f32 %v517, %v693
      %v702 = vmul.f32 %v518, %v694
      %v703 = vmul.f32 %v519, %v695
      %v704 = vmul.f32 %v520, %v696
      %v705 = vmul.f32 %v611, %v697
      %v706 = vmul.f32 %v689, %v698
      %v707 = vadd.f32 %v681, %v699
      %v708 = vadd.f32 %v682, %v700
      %v709 = vadd.f32 %v683, %v701
      %v710 = vadd.f32 %v684, %v702
      %v711 = vadd.f32 %v685, %v703
      %v712 = vadd.f32 %v686, %v704
      %v713 = vadd.f32 %v687, %v705
      %v714 = vadd.f32 %v688, %v706
      %v715 = vld [vmem:[#allocation2 + $0x50] sm:$0xff]
      %s716 = scalar_lea.vmem %s10, 448
      %v717 = vld [vmem:[%s716] sm:$0xff]
      %v718 = vld [vmem:[%s716 + $0x8] sm:$0xff]
      %v719 = vld [vmem:[%s716 + $0x10] sm:$0xff]
      %v720 = vld [vmem:[%s716 + $0x18] sm:$0xff]
      %v721 = vld [vmem:[%s716 + $0x20] sm:$0xff]
      %v722 = vld [vmem:[%s716 + $0x28] sm:$0xff]
      %v723 = vld [vmem:[%s716 + $0x30] sm:$0xff]
      %v724 = vld [vmem:[%s716 + $0x38] sm:$0xff]
      %v725 = vmul.f32 %v547, %v717
      %v726 = vmul.f32 %v548, %v718
      %v727 = vmul.f32 %v549, %v719
      %v728 = vmul.f32 %v550, %v720
      %v729 = vmul.f32 %v551, %v721
      %v730 = vmul.f32 %v552, %v722
      %v731 = vmul.f32 %v637, %v723
      %v732 = vmul.f32 %v715, %v724
      %v733 = vadd.f32 %v707, %v725
      %v734 = vadd.f32 %v708, %v726
      %v735 = vadd.f32 %v709, %v727
      %v736 = vadd.f32 %v710, %v728
      %v737 = vadd.f32 %v711, %v729
      %v738 = vadd.f32 %v712, %v730
      %v739 = vadd.f32 %v713, %v731
      %v740 = vadd.f32 %v714, %v732
      %v741 = vld [vmem:[#allocation2 + $0x51] sm:$0xff]
      %s742 = scalar_lea.vmem %s10, 512
      %v743 = vld [vmem:[%s742] sm:$0xff]
      %v744 = vld [vmem:[%s742 + $0x8] sm:$0xff]
      %v745 = vld [vmem:[%s742 + $0x10] sm:$0xff]
      %v746 = vld [vmem:[%s742 + $0x18] sm:$0xff]
      %v747 = vld [vmem:[%s742 + $0x20] sm:$0xff]
      %v748 = vld [vmem:[%s742 + $0x28] sm:$0xff]
      %v749 = vld [vmem:[%s742 + $0x30] sm:$0xff]
      %v750 = vld [vmem:[%s742 + $0x38] sm:$0xff]
      %v751 = vmul.f32 %v580, %v743
      %v752 = vmul.f32 %v581, %v744
      %v753 = vmul.f32 %v582, %v745
      %v754 = vmul.f32 %v583, %v746
      %v755 = vmul.f32 %v584, %v747
      %v756 = vmul.f32 %v585, %v748
      %v757 = vmul.f32 %v663, %v749
      %v758 = vmul.f32 %v741, %v750
      %v759 = vadd.f32 %v733, %v751
      %v760 = vadd.f32 %v734, %v752
      %v761 = vadd.f32 %v735, %v753
      %v762 = vadd.f32 %v736, %v754
      %v763 = vadd.f32 %v737, %v755
      %v764 = vadd.f32 %v738, %v756
      %v765 = vadd.f32 %v739, %v757
      %v766 = vadd.f32 %v740, %v758
      %v767 = vld [vmem:[%s5] sm:$0xff]
      %v768 = vld [vmem:[%s5 + $0x8] sm:$0xff]
      %vm769 = vcmask 523264
      %v771 = vsel %vm769, %v767, 0
      %v774 = vsel %vm769, %v768, 0
      %776 = vmatpush.msra.mxu0 0.0
      %777 = vmatpush.msra.mxu0 0.0
      %778 = vmatpush.msra.mxu0 0.0
      %779 = vmatpush.msra.mxu0 0.0
      %780 = vmatpush.msra.mxu0 0.0
      %781 = vmatpush.msra.mxu0 0.0
      %782 = vmatpush.msra.mxu0 0.0
      %783 = vmatpush.msra.mxu0 0.0
      %784 = vmatpush.msra.mxu0 %v463
      %785 = vmatpush.msra.mxu0 %v460
      %786 = vmatpush.msra.mxu0 %v457
      %787 = vmatpush.msra.mxu0 %v454
      %788 = vmatpush.msra.mxu0 %v451
      %789 = vmatpush.msra.mxu0 %v448
      %790 = vmatpush.msra.mxu0 %v445
      %791 = vmatpush.msra.mxu0 %v442
      %792 = vmatmul.f32.gmra.mxu0 %v771
      %v793 = vpop.f32.mrf.mxu0
      %v794 = vadd.f32 0.0, %v793
      %795 = vmatmul.f32.gmra.mxu0 %v774
      %v796 = vpop.f32.mrf.mxu0
      %v797 = vadd.f32 0.0, %v796
      %798 = vdwg.mxu0
      %v799 = vld [vmem:[%s6] sm:$0xff]
      %v800 = vld [vmem:[%s6 + $0x8] sm:$0xff]
      %v801 = vld [vmem:[%s6 + $0x10] sm:$0xff]
      %v802 = vld [vmem:[%s6 + $0x18] sm:$0xff]
      %v803 = vld [vmem:[%s6 + $0x20] sm:$0xff]
      %v804 = vld [vmem:[%s6 + $0x28] sm:$0xff]
      %v805 = vld [vmem:[%s6 + $0x30] sm:$0xff]
      %v806 = vld [vmem:[%s6 + $0x38] sm:$0xff]
      %v807 = vmul.f32 %v794, %v799
      %v808 = vmul.f32 %v797, %v800
      %v809 = vmul.f32 %v794, %v801
      %v810 = vmul.f32 %v797, %v802
      %v811 = vmul.f32 %v794, %v803
      %v812 = vmul.f32 %v797, %v804
      %v813 = vmul.f32 %v794, %v805
      %v814 = vmul.f32 %v797, %v806
      %v815 = vld [vmem:[%s8] sm:$0xff]
      %v816 = vld [vmem:[%s8 + $0x8] sm:$0xff]
      %v817 = vld [vmem:[%s8 + $0x10] sm:$0xff]
      %v818 = vld [vmem:[%s8 + $0x18] sm:$0xff]
      %v819 = vld [vmem:[%s8 + $0x20] sm:$0xff]
      %v820 = vld [vmem:[%s8 + $0x28] sm:$0xff]
      %v821 = vld [vmem:[%s8 + $0x30] sm:$0xff]
      %v822 = vld [vmem:[%s8 + $0x38] sm:$0xff]
      %823 = vrot.lane.b32.xlu0 %v442, 96
      %v824 = vpop.permute.xlu0 %823
      %825 = vrot.lane.b32.xlu0 %v445, 96
      %v826 = vpop.permute.xlu0 %825
      %827 = vrot.lane.b32.xlu0 %v448, 96
      %v828 = vpop.permute.xlu0 %827
      %829 = vrot.lane.b32.xlu0 %v451, 96
      %v830 = vpop.permute.xlu0 %829
      %831 = vrot.lane.b32.xlu0 %v454, 96
      %v832 = vpop.permute.xlu0 %831
      %833 = vrot.lane.b32.xlu0 %v457, 96
      %v834 = vpop.permute.xlu0 %833
      %835 = vrot.lane.b32.xlu0 %v460, 96
      %v836 = vpop.permute.xlu0 %835
      %837 = vrot.lane.b32.xlu0 %v463, 96
      %v838 = vpop.permute.xlu0 %837
      %v840 = vsel %vm399, %v807, 0
      %v843 = vsel %vm399, %v808, 0
      %v846 = vsel %vm399, %v809, 0
      %v849 = vsel %vm399, %v810, 0
      %v852 = vsel %vm399, %v811, 0
      %v855 = vsel %vm399, %v812, 0
      %v858 = vsel %vm399, %v813, 0
      %v861 = vsel %vm399, %v814, 0
      %v863 = vsel %vm399, %v824, 0
      %v865 = vsel %vm399, %v826, 0
      %v867 = vsel %vm399, %v828, 0
      %v869 = vsel %vm399, %v830, 0
      %v871 = vsel %vm399, %v832, 0
      %v873 = vsel %vm399, %v834, 0
      %v875 = vsel %vm399, %v836, 0
      %v877 = vsel %vm399, %v838, 0
      %879 = vmatpush.xpose.msra.mxu0 0.0
      %880 = vmatpush.xpose.msra.mxu0 0.0
      %881 = vmatpush.xpose.msra.mxu0 0.0
      %882 = vmatpush.xpose.msra.mxu0 0.0
      %883 = vmatpush.xpose.msra.mxu0 0.0
      %884 = vmatpush.xpose.msra.mxu0 0.0
      %885 = vmatpush.xpose.msra.mxu0 0.0
      %886 = vmatpush.xpose.msra.mxu0 0.0
      %887 = vmatpush.xpose.msra.mxu0 %v877
      %888 = vmatpush.xpose.msra.mxu0 %v875
      %889 = vmatpush.xpose.msra.mxu0 %v873
      %890 = vmatpush.xpose.msra.mxu0 %v871
      %891 = vmatpush.xpose.msra.mxu0 %v869
      %892 = vmatpush.xpose.msra.mxu0 %v867
      %893 = vmatpush.xpose.msra.mxu0 %v865
      %894 = vmatpush.xpose.msra.mxu0 %v863
      %895 = vmatmul.f32.gmra.mxu0 %v840
      %v896 = vpop.f32.mrf.mxu0
      %v897 = vadd.f32 %v815, %v896
      %898 = vmatmul.f32.gmra.mxu0 %v843
      %v899 = vpop.f32.mrf.mxu0
      %v900 = vadd.f32 %v816, %v899
      %901 = vmatmul.f32.gmra.mxu0 %v846
      %v902 = vpop.f32.mrf.mxu0
      %v903 = vadd.f32 %v817, %v902
      %904 = vmatmul.f32.gmra.mxu0 %v849
      %v905 = vpop.f32.mrf.mxu0
      %v906 = vadd.f32 %v818, %v905
      %907 = vmatmul.f32.gmra.mxu0 %v852
      %v908 = vpop.f32.mrf.mxu0
      %v909 = vadd.f32 %v819, %v908
      %910 = vmatmul.f32.gmra.mxu0 %v855
      %v911 = vpop.f32.mrf.mxu0
      %v912 = vadd.f32 %v820, %v911
      %913 = vmatmul.f32.gmra.mxu0 %v858
      %v914 = vpop.f32.mrf.mxu0
      %v915 = vadd.f32 %v821, %v914
      %916 = vmatmul.f32.gmra.mxu0 %v861
      %v917 = vpop.f32.mrf.mxu0
      %v918 = vadd.f32 %v822, %v917
      %919 = vdwg.mxu0
      %v920 = vsel %vm769, %v897, -inf
      %921 = vmax.xlane.f32.xlu0 %v920
      %v922 = vpop.xlane.xlu0 %921
      %v923 = vsel %vm769, %v900, -inf
      %924 = vmax.xlane.f32.xlu0 %v923
      %v925 = vpop.xlane.xlu0 %924
      %v926 = vsel %vm769, %v903, -inf
      %927 = vmax.xlane.f32.xlu0 %v926
      %v928 = vpop.xlane.xlu0 %927
      %v929 = vsel %vm769, %v906, -inf
      %930 = vmax.xlane.f32.xlu0 %v929
      %v931 = vpop.xlane.xlu0 %930
      %v932 = vsel %vm769, %v909, -inf
      %933 = vmax.xlane.f32.xlu0 %v932
      %v934 = vpop.xlane.xlu0 %933
      %v935 = vsel %vm769, %v912, -inf
      %936 = vmax.xlane.f32.xlu0 %v935
      %v937 = vpop.xlane.xlu0 %936
      %v938 = vsel %vm769, %v915, -inf
      %939 = vmax.xlane.f32.xlu0 %v938
      %v940 = vpop.xlane.xlu0 %939
      %v941 = vsel %vm769, %v918, -inf
      %942 = vmax.xlane.f32.xlu0 %v941
      %v943 = vpop.xlane.xlu0 %942
      %v944 = vsub.f32 %v897, %v922
      %v945 = vsub.f32 %v900, %v925
      %v946 = vsub.f32 %v903, %v928
      %v947 = vsub.f32 %v906, %v931
      %v948 = vsub.f32 %v909, %v934
      %v949 = vsub.f32 %v912, %v937
      %v950 = vsub.f32 %v915, %v940
      %v951 = vsub.f32 %v918, %v943
      %v952 = vmul.f32 %v944, 1.442695
      %v953 = vpow.pop %v952
      %v954 = vmul.f32 %v945, 1.442695
      %v955 = vpow.pop %v954
      %v956 = vmul.f32 %v946, 1.442695
      %v957 = vpow.pop %v956
      %v958 = vmul.f32 %v947, 1.442695
      %v959 = vpow.pop %v958
      %v960 = vmul.f32 %v948, 1.442695
      %v961 = vpow.pop %v960
      %v962 = vmul.f32 %v949, 1.442695
      %v963 = vpow.pop %v962
      %v964 = vmul.f32 %v950, 1.442695
      %v965 = vpow.pop %v964
      %v966 = vmul.f32 %v951, 1.442695
      %v967 = vpow.pop %v966
      %v968 = vsel %vm769, %v953, 0.0
      %969 = vadd.xlane.f32.xlu0 %v968
      %v970 = vpop.xlane.xlu0 %969
      %v971 = vsel %vm769, %v955, 0.0
      %972 = vadd.xlane.f32.xlu0 %v971
      %v973 = vpop.xlane.xlu0 %972
      %v974 = vsel %vm769, %v957, 0.0
      %975 = vadd.xlane.f32.xlu0 %v974
      %v976 = vpop.xlane.xlu0 %975
      %v977 = vsel %vm769, %v959, 0.0
      %978 = vadd.xlane.f32.xlu0 %v977
      %v979 = vpop.xlane.xlu0 %978
      %v980 = vsel %vm769, %v961, 0.0
      %981 = vadd.xlane.f32.xlu0 %v980
      %v982 = vpop.xlane.xlu0 %981
      %v983 = vsel %vm769, %v963, 0.0
      %984 = vadd.xlane.f32.xlu0 %v983
      %v985 = vpop.xlane.xlu0 %984
      %v986 = vsel %vm769, %v965, 0.0
      %987 = vadd.xlane.f32.xlu0 %v986
      %v988 = vpop.xlane.xlu0 %987
      %v989 = vsel %vm769, %v967, 0.0
      %990 = vadd.xlane.f32.xlu0 %v989
      %v991 = vpop.xlane.xlu0 %990
      %v992 = vrcp.pop %v970
      %v993 = vrcp.pop %v973
      %v994 = vrcp.pop %v976
      %v995 = vrcp.pop %v979
      %v996 = vrcp.pop %v982
      %v997 = vrcp.pop %v985
      %v998 = vrcp.pop %v988
      %v999 = vrcp.pop %v991
      %v1000 = vmul.f32 %v953, %v992
      %v1001 = vmul.f32 %v955, %v993
      %v1002 = vmul.f32 %v957, %v994
      %v1003 = vmul.f32 %v959, %v995
      %v1004 = vmul.f32 %v961, %v996
      %v1005 = vmul.f32 %v963, %v997
      %v1006 = vmul.f32 %v965, %v998
      %v1007 = vmul.f32 %v967, %v999
      %v1009 = vsel %vm769, %v1000, 0
      %v1012 = vsel %vm769, %v1001, 0
      %v1015 = vsel %vm769, %v1002, 0
      %v1018 = vsel %vm769, %v1003, 0
      %v1021 = vsel %vm769, %v1004, 0
      %v1024 = vsel %vm769, %v1005, 0
      %v1027 = vsel %vm769, %v1006, 0
      %v1030 = vsel %vm769, %v1007, 0
      %1032 = vmatpush.msra.mxu0 0.0
      %1033 = vmatpush.msra.mxu0 0.0
      %1034 = vmatpush.msra.mxu0 0.0
      %1035 = vmatpush.msra.mxu0 0.0
      %1036 = vmatpush.msra.mxu0 0.0
      %1037 = vmatpush.msra.mxu0 0.0
      %1038 = vmatpush.msra.mxu0 0.0
      %1039 = vmatpush.msra.mxu0 0.0
      %1040 = vmatpush.msra.mxu0 %v492
      %1041 = vmatpush.msra.mxu0 %v490
      %1042 = vmatpush.msra.mxu0 %v488
      %1043 = vmatpush.msra.mxu0 %v486
      %1044 = vmatpush.msra.mxu0 %v484
      %1045 = vmatpush.msra.mxu0 %v482
      %1046 = vmatpush.msra.mxu0 %v480
      %1047 = vmatpush.msra.mxu0 %v478
      %1048 = vmatmul.f32.gmra.mxu0 %v1009
      %v1049 = vpop.f32.mrf.mxu0
      %v1050 = vadd.f32 0.0, %v1049
      %1051 = vmatmul.f32.gmra.mxu0 %v1012
      %v1052 = vpop.f32.mrf.mxu0
      %v1053 = vadd.f32 0.0, %v1052
      %1054 = vmatmul.f32.gmra.mxu0 %v1015
      %v1055 = vpop.f32.mrf.mxu0
      %v1056 = vadd.f32 0.0, %v1055
      %1057 = vmatmul.f32.gmra.mxu0 %v1018
      %v1058 = vpop.f32.mrf.mxu0
      %v1059 = vadd.f32 0.0, %v1058
      %1060 = vmatmul.f32.gmra.mxu0 %v1021
      %v1061 = vpop.f32.mrf.mxu0
      %v1062 = vadd.f32 0.0, %v1061
      %1063 = vmatmul.f32.gmra.mxu0 %v1024
      %v1064 = vpop.f32.mrf.mxu0
      %v1065 = vadd.f32 0.0, %v1064
      %1066 = vmatmul.f32.gmra.mxu0 %v1027
      %v1067 = vpop.f32.mrf.mxu0
      %v1068 = vadd.f32 0.0, %v1067
      %1069 = vmatmul.f32.gmra.mxu0 %v1030
      %v1070 = vpop.f32.mrf.mxu0
      %v1071 = vadd.f32 0.0, %v1070
      %1072 = vdwg.mxu0
      %v1073 = vmul.f32 %v1050, %v799
      %v1074 = vmul.f32 %v1053, %v800
      %v1075 = vmul.f32 %v1056, %v801
      %v1076 = vmul.f32 %v1059, %v802
      %v1077 = vmul.f32 %v1062, %v803
      %v1078 = vmul.f32 %v1065, %v804
      %v1079 = vmul.f32 %v1068, %v805
      %v1080 = vmul.f32 %v1071, %v806
      %v1081 = vld [vmem:[%s9] sm:$0xff]
      %v1082 = vld [vmem:[%s9 + $0x8] sm:$0xff]
      %v1083 = vld [vmem:[%s9 + $0x10] sm:$0xff]
      %v1084 = vld [vmem:[%s9 + $0x18] sm:$0xff]
      %v1085 = vld [vmem:[%s9 + $0x20] sm:$0xff]
      %v1086 = vld [vmem:[%s9 + $0x28] sm:$0xff]
      %v1087 = vld [vmem:[%s9 + $0x30] sm:$0xff]
      %v1088 = vld [vmem:[%s9 + $0x38] sm:$0xff]
      %v1089 = vsel %vm399, %v442, 0
      %v1091 = vsel %vm399, %v445, 0
      %v1093 = vsel %vm399, %v448, 0
      %v1095 = vsel %vm399, %v451, 0
      %v1097 = vsel %vm399, %v454, 0
      %v1099 = vsel %vm399, %v457, 0
      %v1101 = vsel %vm399, %v460, 0
      %v1103 = vsel %vm399, %v463, 0
      %1105 = vmatpush.xpose.msra.mxu0 0.0
      %1106 = vmatpush.xpose.msra.mxu0 0.0
      %1107 = vmatpush.xpose.msra.mxu0 0.0
      %1108 = vmatpush.xpose.msra.mxu0 0.0
      %1109 = vmatpush.xpose.msra.mxu0 0.0
      %1110 = vmatpush.xpose.msra.mxu0 0.0
      %1111 = vmatpush.xpose.msra.mxu0 0.0
      %1112 = vmatpush.xpose.msra.mxu0 0.0
      %1113 = vmatpush.xpose.msra.mxu0 %v861
      %1114 = vmatpush.xpose.msra.mxu0 %v858
      %1115 = vmatpush.xpose.msra.mxu0 %v855
      %1116 = vmatpush.xpose.msra.mxu0 %v852
      %1117 = vmatpush.xpose.msra.mxu0 %v849
      %1118 = vmatpush.xpose.msra.mxu0 %v846
      %1119 = vmatpush.xpose.msra.mxu0 %v843
      %1120 = vmatpush.xpose.msra.mxu0 %v840
      %1121 = vmatmul.f32.gmra.mxu0 %v1089
      %v1122 = vpop.f32.mrf.mxu0
      %v1123 = vadd.f32 %v1081, %v1122
      %1124 = vmatmul.f32.gmra.mxu0 %v1091
      %v1125 = vpop.f32.mrf.mxu0
      %v1126 = vadd.f32 %v1082, %v1125
      %1127 = vmatmul.f32.gmra.mxu0 %v1093
      %v1128 = vpop.f32.mrf.mxu0
      %v1129 = vadd.f32 %v1083, %v1128
      %1130 = vmatmul.f32.gmra.mxu0 %v1095
      %v1131 = vpop.f32.mrf.mxu0
      %v1132 = vadd.f32 %v1084, %v1131
      %1133 = vmatmul.f32.gmra.mxu0 %v1097
      %v1134 = vpop.f32.mrf.mxu0
      %v1135 = vadd.f32 %v1085, %v1134
      %1136 = vmatmul.f32.gmra.mxu0 %v1099
      %v1137 = vpop.f32.mrf.mxu0
      %v1138 = vadd.f32 %v1086, %v1137
      %1139 = vmatmul.f32.gmra.mxu0 %v1101
      %v1140 = vpop.f32.mrf.mxu0
      %v1141 = vadd.f32 %v1087, %v1140
      %1142 = vmatmul.f32.gmra.mxu0 %v1103
      %v1143 = vpop.f32.mrf.mxu0
      %v1144 = vadd.f32 %v1088, %v1143
      %1145 = vdwg.mxu0
      %v1146 = vsel %vm769, %v1123, -inf
      %1147 = vmax.xlane.f32.xlu0 %v1146
      %v1148 = vpop.xlane.xlu0 %1147
      %v1149 = vsel %vm769, %v1126, -inf
      %1150 = vmax.xlane.f32.xlu0 %v1149
      %v1151 = vpop.xlane.xlu0 %1150
      %v1152 = vsel %vm769, %v1129, -inf
      %1153 = vmax.xlane.f32.xlu0 %v1152
      %v1154 = vpop.xlane.xlu0 %1153
      %v1155 = vsel %vm769, %v1132, -inf
      %1156 = vmax.xlane.f32.xlu0 %v1155
      %v1157 = vpop.xlane.xlu0 %1156
      %v1158 = vsel %vm769, %v1135, -inf
      %1159 = vmax.xlane.f32.xlu0 %v1158
      %v1160 = vpop.xlane.xlu0 %1159
      %v1161 = vsel %vm769, %v1138, -inf
      %1162 = vmax.xlane.f32.xlu0 %v1161
      %v1163 = vpop.xlane.xlu0 %1162
      %v1164 = vsel %vm769, %v1141, -inf
      %1165 = vmax.xlane.f32.xlu0 %v1164
      %v1166 = vpop.xlane.xlu0 %1165
      %v1167 = vsel %vm769, %v1144, -inf
      %1168 = vmax.xlane.f32.xlu0 %v1167
      %v1169 = vpop.xlane.xlu0 %1168
      %v1170 = vsub.f32 %v1123, %v1148
      %v1171 = vsub.f32 %v1126, %v1151
      %v1172 = vsub.f32 %v1129, %v1154
      %v1173 = vsub.f32 %v1132, %v1157
      %v1174 = vsub.f32 %v1135, %v1160
      %v1175 = vsub.f32 %v1138, %v1163
      %v1176 = vsub.f32 %v1141, %v1166
      %v1177 = vsub.f32 %v1144, %v1169
      %v1178 = vmul.f32 %v1170, 1.442695
      %v1179 = vpow.pop %v1178
      %v1180 = vmul.f32 %v1171, 1.442695
      %v1181 = vpow.pop %v1180
      %v1182 = vmul.f32 %v1172, 1.442695
      %v1183 = vpow.pop %v1182
      %v1184 = vmul.f32 %v1173, 1.442695
      %v1185 = vpow.pop %v1184
      %v1186 = vmul.f32 %v1174, 1.442695
      %v1187 = vpow.pop %v1186
      %v1188 = vmul.f32 %v1175, 1.442695
      %v1189 = vpow.pop %v1188
      %v1190 = vmul.f32 %v1176, 1.442695
      %v1191 = vpow.pop %v1190
      %v1192 = vmul.f32 %v1177, 1.442695
      %v1193 = vpow.pop %v1192
      %v1194 = vld [vmem:[%s7] sm:$0xff]
      %v1195 = vld [vmem:[%s7 + $0x8] sm:$0xff]
      %v1196 = vld [vmem:[%s7 + $0x10] sm:$0xff]
      %v1197 = vld [vmem:[%s7 + $0x18] sm:$0xff]
      %v1198 = vld [vmem:[%s7 + $0x20] sm:$0xff]
      %v1199 = vld [vmem:[%s7 + $0x28] sm:$0xff]
      %v1200 = vld [vmem:[%s7 + $0x30] sm:$0xff]
      %v1201 = vld [vmem:[%s7 + $0x38] sm:$0xff]
      %v1203 = vsel %vm769, %v1179, 0
      %v1206 = vsel %vm769, %v1181, 0
      %v1209 = vsel %vm769, %v1183, 0
      %v1212 = vsel %vm769, %v1185, 0
      %v1215 = vsel %vm769, %v1187, 0
      %v1218 = vsel %vm769, %v1189, 0
      %v1221 = vsel %vm769, %v1191, 0
      %v1224 = vsel %vm769, %v1193, 0
      %1226 = vmatpush.msra.mxu0 0.0
      %1227 = vmatpush.msra.mxu0 0.0
      %1228 = vmatpush.msra.mxu0 0.0
      %1229 = vmatpush.msra.mxu0 0.0
      %1230 = vmatpush.msra.mxu0 0.0
      %1231 = vmatpush.msra.mxu0 0.0
      %1232 = vmatpush.msra.mxu0 0.0
      %1233 = vmatpush.msra.mxu0 0.0
      %1234 = vmatpush.msra.mxu0 %v1201
      %1235 = vmatpush.msra.mxu0 %v1200
      %1236 = vmatpush.msra.mxu0 %v1199
      %1237 = vmatpush.msra.mxu0 %v1198
      %1238 = vmatpush.msra.mxu0 %v1197
      %1239 = vmatpush.msra.mxu0 %v1196
      %1240 = vmatpush.msra.mxu0 %v1195
      %1241 = vmatpush.msra.mxu0 %v1194
      %1242 = vmatmul.f32.gmra.mxu0 %v1203
      %v1243 = vpop.f32.mrf.mxu0
      %v1244 = vadd.f32 0.0, %v1243
      %1245 = vmatmul.f32.gmra.mxu0 %v1206
      %v1246 = vpop.f32.mrf.mxu0
      %v1247 = vadd.f32 0.0, %v1246
      %1248 = vmatmul.f32.gmra.mxu0 %v1209
      %v1249 = vpop.f32.mrf.mxu0
      %v1250 = vadd.f32 0.0, %v1249
      %1251 = vmatmul.f32.gmra.mxu0 %v1212
      %v1252 = vpop.f32.mrf.mxu0
      %v1253 = vadd.f32 0.0, %v1252
      %1254 = vmatmul.f32.gmra.mxu0 %v1215
      %v1255 = vpop.f32.mrf.mxu0
      %v1256 = vadd.f32 0.0, %v1255
      %1257 = vmatmul.f32.gmra.mxu0 %v1218
      %v1258 = vpop.f32.mrf.mxu0
      %v1259 = vadd.f32 0.0, %v1258
      %1260 = vmatmul.f32.gmra.mxu0 %v1221
      %v1261 = vpop.f32.mrf.mxu0
      %v1262 = vadd.f32 0.0, %v1261
      %1263 = vmatmul.f32.gmra.mxu0 %v1224
      %v1264 = vpop.f32.mrf.mxu0
      %v1265 = vadd.f32 0.0, %v1264
      %1266 = vdwg.mxu0
      %v1267 = vrcp.pop %v1244
      %v1268 = vrcp.pop %v1247
      %v1269 = vrcp.pop %v1250
      %v1270 = vrcp.pop %v1253
      %v1271 = vrcp.pop %v1256
      %v1272 = vrcp.pop %v1259
      %v1273 = vrcp.pop %v1262
      %v1274 = vrcp.pop %v1265
      %v1275 = vmul.f32 %v1179, %v1267
      %v1276 = vmul.f32 %v1181, %v1268
      %v1277 = vmul.f32 %v1183, %v1269
      %v1278 = vmul.f32 %v1185, %v1270
      %v1279 = vmul.f32 %v1187, %v1271
      %v1280 = vmul.f32 %v1189, %v1272
      %v1281 = vmul.f32 %v1191, %v1273
      %v1282 = vmul.f32 %v1193, %v1274
      %v1284 = vsel %vm769, %v1275, 0
      %v1287 = vsel %vm769, %v1276, 0
      %v1290 = vsel %vm769, %v1277, 0
      %v1293 = vsel %vm769, %v1278, 0
      %v1296 = vsel %vm769, %v1279, 0
      %v1299 = vsel %vm769, %v1280, 0
      %v1302 = vsel %vm769, %v1281, 0
      %v1305 = vsel %vm769, %v1282, 0
      %1307 = vmatpush.msra.mxu0 0.0
      %1308 = vmatpush.msra.mxu0 0.0
      %1309 = vmatpush.msra.mxu0 0.0
      %1310 = vmatpush.msra.mxu0 0.0
      %1311 = vmatpush.msra.mxu0 0.0
      %1312 = vmatpush.msra.mxu0 0.0
      %1313 = vmatpush.msra.mxu0 0.0
      %1314 = vmatpush.msra.mxu0 0.0
      %1315 = vmatpush.msra.mxu0 %v1080
      %1316 = vmatpush.msra.mxu0 %v1079
      %1317 = vmatpush.msra.mxu0 %v1078
      %1318 = vmatpush.msra.mxu0 %v1077
      %1319 = vmatpush.msra.mxu0 %v1076
      %1320 = vmatpush.msra.mxu0 %v1075
      %1321 = vmatpush.msra.mxu0 %v1074
      %1322 = vmatpush.msra.mxu0 %v1073
      %1323 = vmatmul.f32.gmra.mxu0 %v1284
      %v1324 = vpop.f32.mrf.mxu0
      %v1325 = vadd.f32 %v759, %v1324
      %1326 = vmatmul.f32.gmra.mxu0 %v1287
      %v1327 = vpop.f32.mrf.mxu0
      %v1328 = vadd.f32 %v760, %v1327
      %1329 = vmatmul.f32.gmra.mxu0 %v1290
      %v1330 = vpop.f32.mrf.mxu0
      %v1331 = vadd.f32 %v761, %v1330
      %1332 = vmatmul.f32.gmra.mxu0 %v1293
      %v1333 = vpop.f32.mrf.mxu0
      %v1334 = vadd.f32 %v762, %v1333
      %1335 = vmatmul.f32.gmra.mxu0 %v1296
      %v1336 = vpop.f32.mrf.mxu0
      %v1337 = vadd.f32 %v763, %v1336
      %1338 = vmatmul.f32.gmra.mxu0 %v1299
      %v1339 = vpop.f32.mrf.mxu0
      %v1340 = vadd.f32 %v764, %v1339
      %1341 = vmatmul.f32.gmra.mxu0 %v1302
      %v1342 = vpop.f32.mrf.mxu0
      %v1343 = vadd.f32 %v765, %v1342
      %1344 = vmatmul.f32.gmra.mxu0 %v1305
      %v1345 = vpop.f32.mrf.mxu0
      %v1346 = vadd.f32 %v766, %v1345
      %1347 = vdwg.mxu0
      %v1348 = vld [vmem:[%s2] sm:$0xff]
      %v1349 = vld [vmem:[%s2 + $0x8] sm:$0xff]
      %v1350 = vld [vmem:[%s2 + $0x10] sm:$0xff]
      %v1351 = vld [vmem:[%s2 + $0x18] sm:$0xff]
      %v1352 = vld [vmem:[%s3] sm:$0x1]
      %v1354 = vperm.slane %v1352, 0
      %v1357 = vsel %vm399, %v1325, 0
      %v1360 = vsel %vm399, %v1328, 0
      %v1363 = vsel %vm399, %v1331, 0
      %v1366 = vsel %vm399, %v1334, 0
      %v1369 = vsel %vm399, %v1337, 0
      %v1372 = vsel %vm399, %v1340, 0
      %v1375 = vsel %vm399, %v1343, 0
      %v1378 = vsel %vm399, %v1346, 0
      %1380 = vmatpush.msra.mxu0 0.0
      %1381 = vmatpush.msra.mxu0 0.0
      %1382 = vmatpush.msra.mxu0 0.0
      %1383 = vmatpush.msra.mxu0 0.0
      %1384 = vmatpush.msra.mxu0 0.0
      %1385 = vmatpush.msra.mxu0 0.0
      %1386 = vmatpush.msra.mxu0 0.0
      %1387 = vmatpush.msra.mxu0 0.0
      %1388 = vmatpush.msra.mxu0 0.0
      %1389 = vmatpush.msra.mxu0 0.0
      %1390 = vmatpush.msra.mxu0 0.0
      %1391 = vmatpush.msra.mxu0 0.0
      %1392 = vmatpush.msra.mxu0 %v1351
      %1393 = vmatpush.msra.mxu0 %v1350
      %1394 = vmatpush.msra.mxu0 %v1349
      %1395 = vmatpush.msra.mxu0 %v1348
      %1396 = vmatmul.f32.gmra.mxu0 %v1357
      %v1397 = vpop.f32.mrf.mxu0
      %v1398 = vadd.f32 %v1354, %v1397
      %1399 = vmatmul.f32.gmra.mxu0 %v1360
      %v1400 = vpop.f32.mrf.mxu0
      %v1401 = vadd.f32 %v1354, %v1400
      %1402 = vmatmul.f32.gmra.mxu0 %v1363
      %v1403 = vpop.f32.mrf.mxu0
      %v1404 = vadd.f32 %v1354, %v1403
      %1405 = vmatmul.f32.gmra.mxu0 %v1366
      %v1406 = vpop.f32.mrf.mxu0
      %v1407 = vadd.f32 %v1354, %v1406
      %1408 = vmatmul.f32.gmra.mxu0 %v1369
      %v1409 = vpop.f32.mrf.mxu0
      %v1410 = vadd.f32 %v1354, %v1409
      %1411 = vmatmul.f32.gmra.mxu0 %v1372
      %v1412 = vpop.f32.mrf.mxu0
      %v1413 = vadd.f32 %v1354, %v1412
      %1414 = vmatmul.f32.gmra.mxu0 %v1375
      %v1415 = vpop.f32.mrf.mxu0
      %v1416 = vadd.f32 %v1354, %v1415
      %1417 = vmatmul.f32.gmra.mxu0 %v1378
      %v1418 = vpop.f32.mrf.mxu0
      %v1419 = vadd.f32 %v1354, %v1418
      %1420 = vdwg.mxu0
      %1421 = vst.msk [vmem:[%s386] sm:$0xff] %vm399, %v1398
      %1422 = vst.msk [vmem:[%s386 + $0x8] sm:$0xff] %vm399, %v1401
      %1423 = vst.msk [vmem:[%s386 + $0x10] sm:$0xff] %vm399, %v1404
      %1424 = vst.msk [vmem:[%s386 + $0x18] sm:$0xff] %vm399, %v1407
      %1425 = vst.msk [vmem:[%s386 + $0x20] sm:$0xff] %vm399, %v1410
      %1426 = vst.msk [vmem:[%s386 + $0x28] sm:$0xff] %vm399, %v1413
      %1427 = vst.msk [vmem:[%s386 + $0x30] sm:$0xff] %vm399, %v1416
      %1428 = vst.msk [vmem:[%s386 + $0x38] sm:$0xff] %vm399, %v1419
      %p1429 = scmp.lt.s32.totalorder %s22, 1
      %s1430 = scalar_select %p1429, %s22, 1
      %s1431 = smul.addr %s1430, 8
      %s1432 = smul.addr %s1431, 8
      %s1433 = scalar_lea.vmem %s11, %s1432
      // Predicated region
      $region65: #{tpu_custom_call.1} parent=63 // pred_check
        %p1434 = pneg %p276
      $region66: #{tpu_custom_call.1} parent=63 // pred_check_branch
        %1436 = sbr.rel (%p1434) target = $region68
      $region67: #{tpu_custom_call.1} parent=63 // pred_region
        _
      $region68: #{tpu_custom_call.1} parent=63 // pred_fallthru
        _
    $region64: #{tpu_custom_call.1} parent=5 // pred_fallthru
      _
    %p1437 = scmp.le.s32.totalorder 2, %s17
    // Predicated region
    $region69: #{tpu_custom_call.1} parent=5 // pred_check
      %p1438 = pneg %p1437
    $region70: #{tpu_custom_call.1} parent=5 // pred_check_branch
      %1440 = sbr.rel (%p1438) target = $region72
    $region71: #{tpu_custom_call.1} parent=5 // pred_region
      %s1441 = ssub.s32 %s17, 2
      // Predicated region
      $region73: #{tpu_custom_call.1} parent=71 // pred_check
        %p1442 = pneg %p282
      $region74: #{tpu_custom_call.1} parent=71 // pred_check_branch
        %1444 = sbr.rel (%p1442) target = $region76
      $region75: #{tpu_custom_call.1} parent=71 // pred_region
        %p1445 = scmp.lt.s32.totalorder %s23, 1
        %s1446 = scalar_select %p1445, %s23, 1
        %s1447 = smul.addr %s1446, 8
        %s1448 = smul.addr %s1447, 8
        %s1449 = scalar_lea.vmem %s11, %s1448
      $region76: #{tpu_custom_call.1} parent=71 // pred_fallthru
        _
    $region72: #{tpu_custom_call.1} parent=5 // pred_fallthru
      _
  $region6: #{tpu_custom_call.1} parent=0 // loop_footer
    %s21 = sadd.s32 1, %s17
  $region7: #{tpu_custom_call.1} parent=0 // loop_footer_branch
    %16 = sbr.rel target = $region3
  $region8: #{tpu_custom_call.1} parent=0 // loop_exit
    _

</llo_original>
